<compile_context>
chip_gen: v6e
topology: v6e:2x2x1
jax: 0.10.0
libtpu: 0.0.40
codegen_flags: <defaults>
</compile_context>

<pallas_src>
import math
from functools import partial

import jax
import jax.numpy as jnp
from jax.experimental import pallas as pl
from jax.experimental.pallas import tpu as pltpu

# ---- small, self-consistent hyper-parameters ------------------------------
INPUT_DIM  = 16
HIDDEN_DIM = 32
N_LAYERS   = 3
N_COND     = 8
D_COND     = 16
BATCH      = 128          # lane-dense: batch maps to the 128-wide lane axis
BN_EPS     = 1e-5

# ---- static packing layout -------------------------------------------------
# Weight matrices (out, in), in packing order.
W_SHAPES = (
    [(D_COND, N_COND), (D_COND, D_COND),                      # cond MLP
     (HIDDEN_DIM, HIDDEN_DIM), (HIDDEN_DIM, HIDDEN_DIM)]       # time MLP
    + [(HIDDEN_DIM, INPUT_DIM + D_COND)]                       # mlp[0]
    + [(HIDDEN_DIM, HIDDEN_DIM + D_COND)] * (N_LAYERS - 2)     # mlp[1..L-2]
    + [(INPUT_DIM, HIDDEN_DIM)]                                # mlp[L-1]
)
MAX_OUT = max(o for o, _ in W_SHAPES)   # 32
MAX_IN  = max(c for _, c in W_SHAPES)   # 48

W_CW1, W_CW2, W_TW1, W_TW2 = 0, 1, 2, 3
W_MLP0 = 4

# Vector slab columns (each padded to MAX_OUT rows).
V_FREQ = 0
V_CB1, V_CB2, V_TB1, V_TB2 = 1, 2, 3, 4
V_MLPB0 = 5                                # mlp bias i -> V_MLPB0 + i
V_BN0 = V_MLPB0 + N_LAYERS                 # gamma_i -> V_BN0 + 2i, beta_i -> +2i+1
N_VEC = V_BN0 + 2 * (N_LAYERS - 1)

VEC_SIZES = (
    [HIDDEN_DIM // 2, D_COND, D_COND, HIDDEN_DIM, HIDDEN_DIM]
    + [o for o, _ in W_SHAPES[4:]]
    + [HIDDEN_DIM] * (2 * (N_LAYERS - 1))
)


# ---------------------------------------------------------------------------
# math helpers (usable both inside the Pallas kernel and in the jnp reference)
# ---------------------------------------------------------------------------
def _nan_to_num(x):
    # torch.nan_to_num(x, nan=-100.0): NaN -> -100, +inf -> finfo.max, -inf -> finfo.min
    # Fused: one clip (handles +-inf) + one isnan select.
    finfo = jnp.finfo(jnp.float32)
    return jnp.where(jnp.isnan(x), jnp.float32(-100.0),
                     jnp.clip(x, finfo.min, finfo.max))


def _gelu_tanh(x):
    # tanh-approximate GELU (EUP tanh instead of VALU erf chain); ~1e-3 from
    # torch.nn.GELU()'s exact erf formulation.
    c = math.sqrt(2.0 / math.pi)
    return 0.5 * x * (1.0 + jnp.tanh(c * (x + 0.044715 * x * x * x)))


def _gelu_exact(x):
    # torch.nn.GELU() default (erf-based, exact) — used by the jnp reference.
    return 0.5 * x * (1.0 + jax.lax.erf(x * (1.0 / math.sqrt(2.0))))


# ---------------------------------------------------------------------------
# slab accessors (static slices; zero runtime cost beyond tiny vreg selects)
# ---------------------------------------------------------------------------
def _w(w_ref, idx):
    o, c = W_SHAPES[idx]
    return w_ref[idx][:o, :c]                       # (out, in)


def _v(vec_ref, idx):
    n = VEC_SIZES[idx]
    return vec_ref[:n, idx:idx + 1]                 # (n, 1) -> broadcasts over lanes


# ---------------------------------------------------------------------------
# Pallas kernel: entire DenoiseNN forward, transposed (features, batch) layout
# ---------------------------------------------------------------------------
def denoise_kernel(n_layers, x_ref, t_ref, cond_ref, w_ref, vec_ref, out_ref):
    f32 = jnp.float32
    xT = x_ref[...].astype(f32)        # (input_dim, B)
    tT = t_ref[...].astype(f32)        # (1, B)
    cT = cond_ref[...].astype(f32)     # (n_cond, B)

    # ---- cond MLP: nan_to_num -> Linear -> ReLU -> Linear -------------------
    cT = _nan_to_num(cT)
    h = jnp.dot(_w(w_ref, W_CW1), cT, preferred_element_type=f32) + _v(vec_ref, V_CB1)
    h = jnp.maximum(h, 0.0)
    cT = jnp.dot(_w(w_ref, W_CW2), h, preferred_element_type=f32) + _v(vec_ref, V_CB2)

    # ---- time MLP: sinusoidal embedding -> Linear -> GELU -> Linear ---------
    half = HIDDEN_DIM // 2
    freqs = _v(vec_ref, V_FREQ)                      # (half, 1), precomputed
    arg = freqs * tT                                 # (half, B)
    sinT = jnp.sin(arg)
    cosT = jnp.cos(arg)
    tw1 = _w(w_ref, W_TW1)                           # (hidden, hidden)
    # W1 @ cat(sin, cos)^T == W1[:, :half] @ sin^T + W1[:, half:] @ cos^T
    te = (jnp.dot(tw1[:, :half], sinT, preferred_element_type=f32)
          + jnp.dot(tw1[:, half:], cosT, preferred_element_type=f32)
          + _v(vec_ref, V_TB1))
    te = _gelu_tanh(te)
    te = jnp.dot(_w(w_ref, W_TW2), te, preferred_element_type=f32) + _v(vec_ref, V_TB2)

    # ---- main MLP stack ------------------------------------------------------
    hT = xT
    for i in range(n_layers - 1):
        w = _w(w_ref, W_MLP0 + i)                    # (hidden, d_in + d_cond)
        d_in = hT.shape[0]
        # W @ cat(h, cond)^T == W[:, :d_in] @ h^T + W[:, d_in:] @ cond^T
        z = (jnp.dot(w[:, :d_in], hT, preferred_element_type=f32)
             + jnp.dot(w[:, d_in:], cT, preferred_element_type=f32)
             + _v(vec_ref, V_MLPB0 + i))
        z = jnp.maximum(z, 0.0) + te
        # BatchNorm1d (training-mode forward, biased batch variance).
        # Batch axis is the lane axis -> XLU lane reductions.
        gamma = _v(vec_ref, V_BN0 + 2 * i)
        beta  = _v(vec_ref, V_BN0 + 2 * i + 1)
        mean = jnp.mean(z, axis=-1, keepdims=True)
        var  = jnp.mean((z - mean) ** 2, axis=-1, keepdims=True)
        hT = gamma * (z - mean) * jax.lax.rsqrt(var + BN_EPS) + beta

    # ---- final linear --------------------------------------------------------
    wlast = _w(w_ref, W_MLP0 + n_layers - 1)
    out = (jnp.dot(wlast, hT, preferred_element_type=f32)
           + _v(vec_ref, V_MLPB0 + n_layers - 1))
    out_ref[...] = out.astype(out_ref.dtype)         # (input_dim, B): lane-dense store


# ---------------------------------------------------------------------------
# wrapper
# ---------------------------------------------------------------------------
def denoise_nn_forward(x, t, cond, w_slab, vec_slab, *, n_layers=N_LAYERS):
    B = x.shape[0]
    cond2d = cond.reshape(-1, N_COND)                # torch.reshape(cond, (-1, n_cond))
    # Transpose to (features, batch) so batch maps to lanes inside the kernel.
    xT = x.T.astype(jnp.float32)                     # (input_dim, B)
    tT = t.reshape(1, -1).astype(jnp.float32)        # (1, B)
    cT = cond2d.T.astype(jnp.float32)                # (n_cond, B)

    vmem = pl.BlockSpec(memory_space=pltpu.MemorySpace.VMEM)
    outT = pl.pallas_call(
        partial(denoise_kernel, n_layers),
        out_shape=jax.ShapeDtypeStruct((INPUT_DIM, B), jnp.float32),
        in_specs=[vmem] * 5,                         # x, t, cond, weight slab, vector slab
        out_specs=vmem,
    )(xT, tT, cT, w_slab, vec_slab)
    return outT.T                                    # back to (B, input_dim)


# ---------------------------------------------------------------------------
# parameter packing: 22 tiny tensors -> 2 consolidated slabs (5 kernel DMAs)
# ---------------------------------------------------------------------------
def pack_params(weights, vectors):
    w_slab = jnp.zeros((len(W_SHAPES), MAX_OUT, MAX_IN), jnp.float32)
    for i, w in enumerate(weights):
        o, c = w.shape
        w_slab = w_slab.at[i, :o, :c].set(w)

    half = HIDDEN_DIM // 2
    scale = math.log(10000.0) / (half - 1)
    freqs = jnp.exp(-scale * jnp.arange(half, dtype=jnp.float32))

    cols = [freqs] + list(vectors)
    assert len(cols) == N_VEC
    vec_slab = jnp.zeros((MAX_OUT, N_VEC), jnp.float32)
    for j, v in enumerate(cols):
        vec_slab = vec_slab.at[:v.shape[0], j].set(v)
    return w_slab, vec_slab


# ---------------------------------------------------------------------------
# deterministic parameter init (PyTorch-style uniform +-1/sqrt(fan_in))
# ---------------------------------------------------------------------------
def init_params(key):
    def linear(k, fan_in, fan_out):
        kw, kb = jax.random.split(k)
        bound = 1.0 / math.sqrt(fan_in)
        w = jax.random.uniform(kw, (fan_out, fan_in), jnp.float32, -bound, bound)
        b = jax.random.uniform(kb, (fan_out,), jnp.float32, -bound, bound)
        return w, b

    n_lin = len(W_SHAPES)                            # 4 + N_LAYERS
    keys = jax.random.split(key, n_lin + (N_LAYERS - 1))

    weights, vectors = [], []
    for i, (o, c) in enumerate(W_SHAPES):
        w, b = linear(keys[i], c, o)
        weights.append(w)
        vectors.append(b)                            # cb1, cb2, tb1, tb2, mlp biases

    # BatchNorm affine params (perturbed from ones/zeros init, deterministic)
    for i in range(N_LAYERS - 1):
        kg, kb = jax.random.split(keys[n_lin + i])
        gamma = 1.0 + 0.1 * jax.random.normal(kg, (HIDDEN_DIM,), jnp.float32)
        beta = 0.1 * jax.random.normal(kb, (HIDDEN_DIM,), jnp.float32)
        vectors += [gamma, beta]
    return weights, vectors


# ---------------------------------------------------------------------------
# pure-JAX reference (batch-major, exact erf GELU == torch semantics)
# ---------------------------------------------------------------------------
def denoise_nn_reference(x, t, cond, weights, vectors, *, n_layers=N_LAYERS):
    cw1, cw2, tw1, tw2 = weights[:4]
    mlp_w = weights[4:]
    cb1, cb2, tb1, tb2 = vectors[:4]
    mlp_b = vectors[4:4 + n_layers]
    bn = vectors[4 + n_layers:]

    cond = cond.reshape(-1, N_COND)
    cond = _nan_to_num(cond)
    cond = jnp.maximum(cond @ cw1.T + cb1, 0.0) @ cw2.T + cb2

    half = HIDDEN_DIM // 2
    freqs = jnp.exp(-jnp.arange(half, dtype=jnp.float32) * (math.log(10000.0) / (half - 1)))
    arg = t[:, None] * freqs[None, :]
    emb = jnp.concatenate([jnp.sin(arg), jnp.cos(arg)], axis=-1)
    te = _gelu_exact(emb @ tw1.T + tb1) @ tw2.T + tb2

    h = x
    for i in range(n_layers - 1):
        w, b = mlp_w[i], mlp_b[i]
        z = jnp.concatenate([h, cond], axis=1) @ w.T + b
        z = jnp.maximum(z, 0.0) + te
        gamma, beta = bn[2 * i], bn[2 * i + 1]
        mean = jnp.mean(z, axis=0, keepdims=True)
        var = jnp.mean((z - mean) ** 2, axis=0, keepdims=True)
        h = gamma * (z - mean) / jnp.sqrt(var + BN_EPS) + beta
    return h @ mlp_w[-1].T + mlp_b[-1]


if __name__ == "__main__":
    key = jax.random.PRNGKey(0)
    kx, kt, kc, kp = jax.random.split(key, 4)

    x = jax.random.normal(kx, (BATCH, INPUT_DIM), jnp.float32)
    t = jax.random.uniform(kt, (BATCH,), jnp.float32, 0.0, 1000.0)
    cond = jax.random.normal(kc, (BATCH, N_COND), jnp.float32)
    cond = cond.at[0, 0].set(jnp.nan)   # exercise the nan_to_num path

    weights, vectors = init_params(kp)
    w_slab, vec_slab = pack_params(weights, vectors)

    out = denoise_nn_forward(x, t, cond, w_slab, vec_slab)
    out = jax.block_until_ready(out)

    ref = denoise_nn_reference(x, t, cond, weights, vectors)
    assert out.shape == (BATCH, INPUT_DIM)
    assert bool(jnp.all(jnp.isfinite(out)))
    assert bool(jnp.allclose(out, ref, rtol=1e-2, atol=1e-2)), \
        f"max abs err {float(jnp.max(jnp.abs(out - ref)))}"

    print("KERNEL_OK")
</pallas_src>

<mosaic_0001>
module attributes {stable_mosaic.version = 11 : i64} {
  func.func @denoise_kernel(%arg0: memref<16x128xf32, #tpu.memory_space<vmem>>, %arg1: memref<1x128xf32, #tpu.memory_space<vmem>>, %arg2: memref<8x128xf32, #tpu.memory_space<vmem>>, %arg3: memref<7x32x48xf32, #tpu.memory_space<vmem>>, %arg4: memref<32x12xf32, #tpu.memory_space<vmem>>, %arg5: memref<16x128xf32, #tpu.memory_space<vmem>>) attributes {dimension_semantics = [], scalar_prefetch = 0 : i64, scratch_operands = 0 : i64, tpu.core_type = #tpu.core_type<tc>} {
    %c0 = arith.constant 0 : index
    %c0_0 = arith.constant 0 : index
    %0 = vector.load %arg0[%c0, %c0_0] : memref<16x128xf32, #tpu.memory_space<vmem>>, vector<16x128xf32>
    %c0_1 = arith.constant 0 : index
    %c0_2 = arith.constant 0 : index
    %1 = vector.load %arg1[%c0_1, %c0_2] : memref<1x128xf32, #tpu.memory_space<vmem>>, vector<1x128xf32>
    %c0_3 = arith.constant 0 : index
    %c0_4 = arith.constant 0 : index
    %2 = vector.load %arg2[%c0_3, %c0_4] : memref<8x128xf32, #tpu.memory_space<vmem>>, vector<8x128xf32>
    %3 = arith.cmpf one, %2, %2 : vector<8x128xf32>
    %cst = arith.constant -3.40282347E+38 : f32
    %cst_5 = arith.constant 3.40282347E+38 : f32
    %4 = vector.broadcast %cst : f32 to vector<8x128xf32>
    %5 = arith.maximumf %4, %2 : vector<8x128xf32>
    %6 = vector.broadcast %cst_5 : f32 to vector<8x128xf32>
    %7 = arith.minimumf %6, %5 : vector<8x128xf32>
    %cst_6 = arith.constant -1.000000e+02 : f32
    %8 = vector.broadcast %cst_6 : f32 to vector<8x128xf32>
    %9 = arith.select %3, %8, %7 : vector<8x128xi1>, vector<8x128xf32>
    %c0_7 = arith.constant 0 : index
    %c0_8 = arith.constant 0 : index
    %c0_9 = arith.constant 0 : index
    %10 = vector.load %arg3[%c0_7, %c0_8, %c0_9] : memref<7x32x48xf32, #tpu.memory_space<vmem>>, vector<1x32x48xf32>
    %11 = vector.shape_cast %10 : vector<1x32x48xf32> to vector<32x48xf32>
    %12 = vector.extract_strided_slice %11 {offsets = [0, 0], sizes = [16, 8], strides = [1, 1]} : vector<32x48xf32> to vector<16x8xf32>
    %cst_10 = arith.constant dense<0.000000e+00> : vector<16x128xf32>
    %13 = tpu.matmul %12, %9, %cst_10 {dimension_numbers = #tpu.dot_dimension_numbers<[1], [0], [0], [1], [0, 0, 1, 1], [], []>} : vector<16x8xf32>, vector<8x128xf32>, vector<16x128xf32> -> vector<16x128xf32>
    %c0_11 = arith.constant 0 : index
    %c1 = arith.constant 1 : index
    %14 = vector.load %arg4[%c0_11, %c1] : memref<32x12xf32, #tpu.memory_space<vmem>>, vector<16x1xf32>
    %15 = vector.broadcast %14 : vector<16x1xf32> to vector<16x128xf32>
    %16 = arith.addf %13, %15 : vector<16x128xf32>
    %cst_12 = arith.constant 0.000000e+00 : f32
    %17 = vector.broadcast %cst_12 : f32 to vector<16x128xf32>
    %18 = arith.maximumf %16, %17 : vector<16x128xf32>
    %c1_13 = arith.constant 1 : index
    %c0_14 = arith.constant 0 : index
    %c0_15 = arith.constant 0 : index
    %19 = vector.load %arg3[%c1_13, %c0_14, %c0_15] : memref<7x32x48xf32, #tpu.memory_space<vmem>>, vector<1x32x48xf32>
    %20 = vector.shape_cast %19 : vector<1x32x48xf32> to vector<32x48xf32>
    %21 = vector.extract_strided_slice %20 {offsets = [0, 0], sizes = [16, 16], strides = [1, 1]} : vector<32x48xf32> to vector<16x16xf32>
    %cst_16 = arith.constant dense<0.000000e+00> : vector<16x128xf32>
    %22 = tpu.matmul %21, %18, %cst_16 {dimension_numbers = #tpu.dot_dimension_numbers<[1], [0], [0], [1], [0, 0, 1, 1], [], []>} : vector<16x16xf32>, vector<16x128xf32>, vector<16x128xf32> -> vector<16x128xf32>
    %c0_17 = arith.constant 0 : index
    %c2 = arith.constant 2 : index
    %23 = vector.load %arg4[%c0_17, %c2] : memref<32x12xf32, #tpu.memory_space<vmem>>, vector<16x1xf32>
    %24 = vector.broadcast %23 : vector<16x1xf32> to vector<16x128xf32>
    %25 = arith.addf %22, %24 : vector<16x128xf32>
    %c0_18 = arith.constant 0 : index
    %c0_19 = arith.constant 0 : index
    %26 = vector.load %arg4[%c0_18, %c0_19] : memref<32x12xf32, #tpu.memory_space<vmem>>, vector<16x1xf32>
    %27 = vector.broadcast %26 : vector<16x1xf32> to vector<16x128xf32>
    %28 = vector.broadcast %1 : vector<1x128xf32> to vector<16x128xf32>
    %29 = arith.mulf %27, %28 : vector<16x128xf32>
    %30 = math.sin %29 : vector<16x128xf32>
    %31 = math.cos %29 : vector<16x128xf32>
    %c2_20 = arith.constant 2 : index
    %c0_21 = arith.constant 0 : index
    %c0_22 = arith.constant 0 : index
    %32 = vector.load %arg3[%c2_20, %c0_21, %c0_22] : memref<7x32x48xf32, #tpu.memory_space<vmem>>, vector<1x32x48xf32>
    %33 = vector.shape_cast %32 : vector<1x32x48xf32> to vector<32x48xf32>
    %34 = vector.extract_strided_slice %33 {offsets = [0, 0], sizes = [32, 32], strides = [1, 1]} : vector<32x48xf32> to vector<32x32xf32>
    %35 = vector.extract_strided_slice %34 {offsets = [0, 0], sizes = [32, 16], strides = [1, 1]} : vector<32x32xf32> to vector<32x16xf32>
    %cst_23 = arith.constant dense<0.000000e+00> : vector<32x128xf32>
    %36 = tpu.matmul %35, %30, %cst_23 {dimension_numbers = #tpu.dot_dimension_numbers<[1], [0], [0], [1], [0, 0, 1, 1], [], []>} : vector<32x16xf32>, vector<16x128xf32>, vector<32x128xf32> -> vector<32x128xf32>
    %37 = vector.extract_strided_slice %34 {offsets = [0, 16], sizes = [32, 16], strides = [1, 1]} : vector<32x32xf32> to vector<32x16xf32>
    %cst_24 = arith.constant dense<0.000000e+00> : vector<32x128xf32>
    %38 = tpu.matmul %37, %31, %cst_24 {dimension_numbers = #tpu.dot_dimension_numbers<[1], [0], [0], [1], [0, 0, 1, 1], [], []>} : vector<32x16xf32>, vector<16x128xf32>, vector<32x128xf32> -> vector<32x128xf32>
    %39 = arith.addf %36, %38 : vector<32x128xf32>
    %c0_25 = arith.constant 0 : index
    %c3 = arith.constant 3 : index
    %40 = vector.load %arg4[%c0_25, %c3] : memref<32x12xf32, #tpu.memory_space<vmem>>, vector<32x1xf32>
    %41 = vector.broadcast %40 : vector<32x1xf32> to vector<32x128xf32>
    %42 = arith.addf %39, %41 : vector<32x128xf32>
    %cst_26 = arith.constant 5.000000e-01 : f32
    %43 = vector.broadcast %cst_26 : f32 to vector<32x128xf32>
    %44 = arith.mulf %43, %42 : vector<32x128xf32>
    %cst_27 = arith.constant 4.471500e-02 : f32
    %45 = vector.broadcast %cst_27 : f32 to vector<32x128xf32>
    %46 = arith.mulf %45, %42 : vector<32x128xf32>
    %47 = arith.mulf %46, %42 : vector<32x128xf32>
    %48 = arith.mulf %47, %42 : vector<32x128xf32>
    %49 = arith.addf %42, %48 : vector<32x128xf32>
    %cst_28 = arith.constant 0.797884583 : f32
    %50 = vector.broadcast %cst_28 : f32 to vector<32x128xf32>
    %51 = arith.mulf %50, %49 : vector<32x128xf32>
    %52 = math.tanh %51 : vector<32x128xf32>
    %cst_29 = arith.constant 1.000000e+00 : f32
    %53 = vector.broadcast %cst_29 : f32 to vector<32x128xf32>
    %54 = arith.addf %53, %52 : vector<32x128xf32>
    %55 = arith.mulf %44, %54 : vector<32x128xf32>
    %c3_30 = arith.constant 3 : index
    %c0_31 = arith.constant 0 : index
    %c0_32 = arith.constant 0 : index
    %56 = vector.load %arg3[%c3_30, %c0_31, %c0_32] : memref<7x32x48xf32, #tpu.memory_space<vmem>>, vector<1x32x48xf32>
    %57 = vector.shape_cast %56 : vector<1x32x48xf32> to vector<32x48xf32>
    %58 = vector.extract_strided_slice %57 {offsets = [0, 0], sizes = [32, 32], strides = [1, 1]} : vector<32x48xf32> to vector<32x32xf32>
    %cst_33 = arith.constant dense<0.000000e+00> : vector<32x128xf32>
    %59 = tpu.matmul %58, %55, %cst_33 {dimension_numbers = #tpu.dot_dimension_numbers<[1], [0], [0], [1], [0, 0, 1, 1], [], []>} : vector<32x32xf32>, vector<32x128xf32>, vector<32x128xf32> -> vector<32x128xf32>
    %c0_34 = arith.constant 0 : index
    %c4 = arith.constant 4 : index
    %60 = vector.load %arg4[%c0_34, %c4] : memref<32x12xf32, #tpu.memory_space<vmem>>, vector<32x1xf32>
    %61 = vector.broadcast %60 : vector<32x1xf32> to vector<32x128xf32>
    %62 = arith.addf %59, %61 : vector<32x128xf32>
    %c4_35 = arith.constant 4 : index
    %c0_36 = arith.constant 0 : index
    %c0_37 = arith.constant 0 : index
    %63 = vector.load %arg3[%c4_35, %c0_36, %c0_37] : memref<7x32x48xf32, #tpu.memory_space<vmem>>, vector<1x32x48xf32>
    %64 = vector.shape_cast %63 : vector<1x32x48xf32> to vector<32x48xf32>
    %65 = vector.extract_strided_slice %64 {offsets = [0, 0], sizes = [32, 32], strides = [1, 1]} : vector<32x48xf32> to vector<32x32xf32>
    %66 = vector.extract_strided_slice %65 {offsets = [0, 0], sizes = [32, 16], strides = [1, 1]} : vector<32x32xf32> to vector<32x16xf32>
    %cst_38 = arith.constant dense<0.000000e+00> : vector<32x128xf32>
    %67 = tpu.matmul %66, %0, %cst_38 {dimension_numbers = #tpu.dot_dimension_numbers<[1], [0], [0], [1], [0, 0, 1, 1], [], []>} : vector<32x16xf32>, vector<16x128xf32>, vector<32x128xf32> -> vector<32x128xf32>
    %68 = vector.extract_strided_slice %65 {offsets = [0, 16], sizes = [32, 16], strides = [1, 1]} : vector<32x32xf32> to vector<32x16xf32>
    %cst_39 = arith.constant dense<0.000000e+00> : vector<32x128xf32>
    %69 = tpu.matmul %68, %25, %cst_39 {dimension_numbers = #tpu.dot_dimension_numbers<[1], [0], [0], [1], [0, 0, 1, 1], [], []>} : vector<32x16xf32>, vector<16x128xf32>, vector<32x128xf32> -> vector<32x128xf32>
    %70 = arith.addf %67, %69 : vector<32x128xf32>
    %c0_40 = arith.constant 0 : index
    %c5 = arith.constant 5 : index
    %71 = vector.load %arg4[%c0_40, %c5] : memref<32x12xf32, #tpu.memory_space<vmem>>, vector<32x1xf32>
    %72 = vector.broadcast %71 : vector<32x1xf32> to vector<32x128xf32>
    %73 = arith.addf %70, %72 : vector<32x128xf32>
    %cst_41 = arith.constant 0.000000e+00 : f32
    %74 = vector.broadcast %cst_41 : f32 to vector<32x128xf32>
    %75 = arith.maximumf %73, %74 : vector<32x128xf32>
    %76 = arith.addf %75, %62 : vector<32x128xf32>
    %c0_42 = arith.constant 0 : index
    %c8 = arith.constant 8 : index
    %77 = vector.load %arg4[%c0_42, %c8] : memref<32x12xf32, #tpu.memory_space<vmem>>, vector<32x1xf32>
    %c0_43 = arith.constant 0 : index
    %c9 = arith.constant 9 : index
    %78 = vector.load %arg4[%c0_43, %c9] : memref<32x12xf32, #tpu.memory_space<vmem>>, vector<32x1xf32>
    %cst_44 = arith.constant dense<0.000000e+00> : vector<32xf32>
    %79 = vector.multi_reduction <add>, %76, %cst_44 [1] : vector<32x128xf32> to vector<32xf32>
    %80 = vector.shape_cast %79 : vector<32xf32> to vector<32x1xf32>
    %cst_45 = arith.constant 1.280000e+02 : f32
    %81 = vector.broadcast %cst_45 : f32 to vector<32x1xf32>
    %82 = arith.divf %80, %81 : vector<32x1xf32>
    %83 = vector.broadcast %82 : vector<32x1xf32> to vector<32x128xf32>
    %84 = arith.subf %76, %83 : vector<32x128xf32>
    %85 = arith.mulf %84, %84 : vector<32x128xf32>
    %cst_46 = arith.constant dense<0.000000e+00> : vector<32xf32>
    %86 = vector.multi_reduction <add>, %85, %cst_46 [1] : vector<32x128xf32> to vector<32xf32>
    %87 = vector.shape_cast %86 : vector<32xf32> to vector<32x1xf32>
    %cst_47 = arith.constant 1.280000e+02 : f32
    %88 = vector.broadcast %cst_47 : f32 to vector<32x1xf32>
    %89 = arith.divf %87, %88 : vector<32x1xf32>
    %90 = vector.broadcast %82 : vector<32x1xf32> to vector<32x128xf32>
    %91 = arith.subf %76, %90 : vector<32x128xf32>
    %92 = vector.broadcast %77 : vector<32x1xf32> to vector<32x128xf32>
    %93 = arith.mulf %92, %91 : vector<32x128xf32>
    %cst_48 = arith.constant 9.99999974E-6 : f32
    %94 = vector.broadcast %cst_48 : f32 to vector<32x1xf32>
    %95 = arith.addf %89, %94 : vector<32x1xf32>
    %96 = math.rsqrt %95 : vector<32x1xf32>
    %97 = vector.broadcast %96 : vector<32x1xf32> to vector<32x128xf32>
    %98 = arith.mulf %93, %97 : vector<32x128xf32>
    %99 = vector.broadcast %78 : vector<32x1xf32> to vector<32x128xf32>
    %100 = arith.addf %98, %99 : vector<32x128xf32>
    %c5_49 = arith.constant 5 : index
    %c0_50 = arith.constant 0 : index
    %c0_51 = arith.constant 0 : index
    %101 = vector.load %arg3[%c5_49, %c0_50, %c0_51] : memref<7x32x48xf32, #tpu.memory_space<vmem>>, vector<1x32x48xf32>
    %102 = vector.shape_cast %101 : vector<1x32x48xf32> to vector<32x48xf32>
    %103 = vector.extract_strided_slice %102 {offsets = [0, 0], sizes = [32, 32], strides = [1, 1]} : vector<32x48xf32> to vector<32x32xf32>
    %cst_52 = arith.constant dense<0.000000e+00> : vector<32x128xf32>
    %104 = tpu.matmul %103, %100, %cst_52 {dimension_numbers = #tpu.dot_dimension_numbers<[1], [0], [0], [1], [0, 0, 1, 1], [], []>} : vector<32x32xf32>, vector<32x128xf32>, vector<32x128xf32> -> vector<32x128xf32>
    %105 = vector.extract_strided_slice %102 {offsets = [0, 32], sizes = [32, 16], strides = [1, 1]} : vector<32x48xf32> to vector<32x16xf32>
    %cst_53 = arith.constant dense<0.000000e+00> : vector<32x128xf32>
    %106 = tpu.matmul %105, %25, %cst_53 {dimension_numbers = #tpu.dot_dimension_numbers<[1], [0], [0], [1], [0, 0, 1, 1], [], []>} : vector<32x16xf32>, vector<16x128xf32>, vector<32x128xf32> -> vector<32x128xf32>
    %107 = arith.addf %104, %106 : vector<32x128xf32>
    %c0_54 = arith.constant 0 : index
    %c6 = arith.constant 6 : index
    %108 = vector.load %arg4[%c0_54, %c6] : memref<32x12xf32, #tpu.memory_space<vmem>>, vector<32x1xf32>
    %109 = vector.broadcast %108 : vector<32x1xf32> to vector<32x128xf32>
    %110 = arith.addf %107, %109 : vector<32x128xf32>
    %cst_55 = arith.constant 0.000000e+00 : f32
    %111 = vector.broadcast %cst_55 : f32 to vector<32x128xf32>
    %112 = arith.maximumf %110, %111 : vector<32x128xf32>
    %113 = arith.addf %112, %62 : vector<32x128xf32>
    %c0_56 = arith.constant 0 : index
    %c10 = arith.constant 10 : index
    %114 = vector.load %arg4[%c0_56, %c10] : memref<32x12xf32, #tpu.memory_space<vmem>>, vector<32x1xf32>
    %c0_57 = arith.constant 0 : index
    %c11 = arith.constant 11 : index
    %115 = vector.load %arg4[%c0_57, %c11] : memref<32x12xf32, #tpu.memory_space<vmem>>, vector<32x1xf32>
    %cst_58 = arith.constant dense<0.000000e+00> : vector<32xf32>
    %116 = vector.multi_reduction <add>, %113, %cst_58 [1] : vector<32x128xf32> to vector<32xf32>
    %117 = vector.shape_cast %116 : vector<32xf32> to vector<32x1xf32>
    %cst_59 = arith.constant 1.280000e+02 : f32
    %118 = vector.broadcast %cst_59 : f32 to vector<32x1xf32>
    %119 = arith.divf %117, %118 : vector<32x1xf32>
    %120 = vector.broadcast %119 : vector<32x1xf32> to vector<32x128xf32>
    %121 = arith.subf %113, %120 : vector<32x128xf32>
    %122 = arith.mulf %121, %121 : vector<32x128xf32>
    %cst_60 = arith.constant dense<0.000000e+00> : vector<32xf32>
    %123 = vector.multi_reduction <add>, %122, %cst_60 [1] : vector<32x128xf32> to vector<32xf32>
    %124 = vector.shape_cast %123 : vector<32xf32> to vector<32x1xf32>
    %cst_61 = arith.constant 1.280000e+02 : f32
    %125 = vector.broadcast %cst_61 : f32 to vector<32x1xf32>
    %126 = arith.divf %124, %125 : vector<32x1xf32>
    %127 = vector.broadcast %119 : vector<32x1xf32> to vector<32x128xf32>
    %128 = arith.subf %113, %127 : vector<32x128xf32>
    %129 = vector.broadcast %114 : vector<32x1xf32> to vector<32x128xf32>
    %130 = arith.mulf %129, %128 : vector<32x128xf32>
    %cst_62 = arith.constant 9.99999974E-6 : f32
    %131 = vector.broadcast %cst_62 : f32 to vector<32x1xf32>
    %132 = arith.addf %126, %131 : vector<32x1xf32>
    %133 = math.rsqrt %132 : vector<32x1xf32>
    %134 = vector.broadcast %133 : vector<32x1xf32> to vector<32x128xf32>
    %135 = arith.mulf %130, %134 : vector<32x128xf32>
    %136 = vector.broadcast %115 : vector<32x1xf32> to vector<32x128xf32>
    %137 = arith.addf %135, %136 : vector<32x128xf32>
    %c6_63 = arith.constant 6 : index
    %c0_64 = arith.constant 0 : index
    %c0_65 = arith.constant 0 : index
    %138 = vector.load %arg3[%c6_63, %c0_64, %c0_65] : memref<7x32x48xf32, #tpu.memory_space<vmem>>, vector<1x32x48xf32>
    %139 = vector.shape_cast %138 : vector<1x32x48xf32> to vector<32x48xf32>
    %140 = vector.extract_strided_slice %139 {offsets = [0, 0], sizes = [16, 32], strides = [1, 1]} : vector<32x48xf32> to vector<16x32xf32>
    %cst_66 = arith.constant dense<0.000000e+00> : vector<16x128xf32>
    %141 = tpu.matmul %140, %137, %cst_66 {dimension_numbers = #tpu.dot_dimension_numbers<[1], [0], [0], [1], [0, 0, 1, 1], [], []>} : vector<16x32xf32>, vector<32x128xf32>, vector<16x128xf32> -> vector<16x128xf32>
    %c0_67 = arith.constant 0 : index
    %c7 = arith.constant 7 : index
    %142 = vector.load %arg4[%c0_67, %c7] : memref<32x12xf32, #tpu.memory_space<vmem>>, vector<16x1xf32>
    %143 = vector.broadcast %142 : vector<16x1xf32> to vector<16x128xf32>
    %144 = arith.addf %141, %143 : vector<16x128xf32>
    %c0_68 = arith.constant 0 : index
    %c0_69 = arith.constant 0 : index
    %145 = vector.load %arg5[%c0_68, %c0_69] : memref<16x128xf32, #tpu.memory_space<vmem>>, vector<16x128xf32>
    tpu.vector_store %arg5[%c0_68, %c0_69], %144 {strides = array<i32>} : memref<16x128xf32, #tpu.memory_space<vmem>>, vector<16x128xf32>,
    return
  }
}

</mosaic_0001>

<llo_original>
// kernel: tpu_custom_call.1
$region0: #{tpu_custom_call.1}
  #allocation0 [shape = 'u32[]', space=smem, size = 0x4, offset = 0x4, fixed_abs, tag = 'smem constant byte address 0x4 - core index']
  #allocation1 [shape = 'u32[144,128]{1,0:T(1,128)}', space=vmem, size = 0x12000, scoped, tag = 'internal scratch']
  %s0 = inlined_call_operand.vmem [shape: f32[16,128], index: 0, kind: input, shape index: {}]
  %s1 = inlined_call_operand.vmem [shape: f32[1,128], index: 1, kind: input, shape index: {}]
  %s2 = inlined_call_operand.vmem [shape: f32[8,128], index: 2, kind: input, shape index: {}]
  %s3 = inlined_call_operand.hbm [shape: f32[7,32,48], index: 3, kind: input, shape index: {}]
  %s4 = inlined_call_operand.vmem [shape: f32[32,12], index: 4, kind: input, shape index: {}]
  %s5 = inlined_call_operand.hbm [shape: f32[16,128], index: 5, kind: output, shape index: {}]
  %s6 = sld [smem:[#allocation0]]
  $region34: #{tpu_custom_call.1} parent=0
    _
  %s8 = ssub.s32 1, %s6
  %s9 = scalar_select 0, %s8, %s6
  $region1: #{tpu_custom_call.1} parent=0
    #allocation2 [shape = 'u8[114688]{0}', space=vmem, size = 0x1c000, scoped, tag = 'input window, operand 3, single buffered']
    #allocation3 [shape = 's32[1]{0}', space=sflag, size = 0x4, scoped, tag = 'scoped memory for tpu_custom_call.1']
    #allocation4 [shape = 's32[1]{0}', space=sflag, size = 0x4, scoped, tag = 'scoped memory for tpu_custom_call.1']
    #allocation5 [shape = 'u8[8192]{0}', space=vmem, size = 0x2000, scoped, tag = 'output window, operand 0, single buffered']
    %10 = vsyncpa [#allocation3], 0
    %11 = vsyncpa [#allocation4], 0
    // Predicated region
    $region2: #{tpu_custom_call.1} parent=1 // pred_check
      _
    $region3: #{tpu_custom_call.1} parent=1 // pred_check_branch
      %13 = sbr.rel (0) target = $region5
    $region4: #{tpu_custom_call.1} parent=1 // pred_region
      _
    $region5: #{tpu_custom_call.1} parent=1 // pred_fallthru
      _
    // Predicated region
    $region6: #{tpu_custom_call.1} parent=1 // pred_check
      _
    $region7: #{tpu_custom_call.1} parent=1 // pred_check_branch
      %15 = sbr.rel (0) target = $region9
    $region8: #{tpu_custom_call.1} parent=1 // pred_region
      _
    $region9: #{tpu_custom_call.1} parent=1 // pred_fallthru
      _
    // Predicated region
    $region10: #{tpu_custom_call.1} parent=1 // pred_check
      _
    $region11: #{tpu_custom_call.1} parent=1 // pred_check_branch
      %17 = sbr.rel (0) target = $region13
    $region12: #{tpu_custom_call.1} parent=1 // pred_region
      _
    $region13: #{tpu_custom_call.1} parent=1 // pred_fallthru
      _
    // Predicated region
    $region14: #{tpu_custom_call.1} parent=1 // pred_check
      _
    $region15: #{tpu_custom_call.1} parent=1 // pred_check_branch
      %19 = sbr.rel (0) target = $region17
    $region16: #{tpu_custom_call.1} parent=1 // pred_region
      %s21 = ssub.s32 3584, 3584
      %22 = vsyncadd [#allocation3], %s21
      %s23 = sshll.u32 [#allocation2], 4
      %s24 = int_to_ptr.vmem [resolvable:$true] %s23
      %29 = dma.hbm_to_vmem [thread:$0]  %s3, 3584, %s24, [#allocation3], 128, 128, 8
    $region17: #{tpu_custom_call.1} parent=1 // pred_fallthru
      _
    // Predicated region
    $region18: #{tpu_custom_call.1} parent=1 // pred_check
      _
    $region19: #{tpu_custom_call.1} parent=1 // pred_check_branch
      %31 = sbr.rel (0) target = $region21
    $region20: #{tpu_custom_call.1} parent=1 // pred_region
      _
    $region21: #{tpu_custom_call.1} parent=1 // pred_fallthru
      _
    // Predicated region
    $region22: #{tpu_custom_call.1} parent=1 // pred_check
      _
    $region23: #{tpu_custom_call.1} parent=1 // pred_check_branch
      %33 = sbr.rel (0) target = $region25
    $region24: #{tpu_custom_call.1} parent=1 // pred_region
      %34 = dma.done [#allocation3], 3584
    $region25: #{tpu_custom_call.1} parent=1 // pred_fallthru
      _
    %v35 = vld [vmem:[%s0] sm:$0xff]
    %v36 = vld [vmem:[%s0 + $0x8] sm:$0xff]
    %v37 = vld [vmem:[%s1] sm:$0x1]
    %v38 = vld [vmem:[%s2] sm:$0xff]
    %vm39 = vcmp.ne.f32.partialorder %v38, %v38
    %v40 = vmax.f32 %v38, -3.4028235e+38
    %v41 = vmin.f32 %v40, 3.4028235e+38
    %v42 = vsel %vm39, -100.0, %v41
    %v43 = vld [vmem:[#allocation2] sm:$0xff]
    %v44 = vld [vmem:[#allocation2 + $0x8] sm:$0xff]
    %v45 = vld [vmem:[%s4] sm:$0xff]
    %v46 = vld [vmem:[%s4 + $0x8] sm:$0xff]
    %48 = vset.pattern.permute.xlu0 1
    %49 = vperm.xlu0 %48, %v45
    %v50 = vpop.permute.xlu0 %49
    %53 = vset.pattern.permute.xlu0 1
    %54 = vperm.xlu0 %53, %v46
    %v55 = vpop.permute.xlu0 %54
    %vm57 = vcmask 64512
    %v59 = vsel %vm57, %v43, 0
    %v62 = vsel %vm57, %v44, 0
    %64 = vmatprep.subr.mxu0 0.0
    %65 = vmatpush1.msra.mxu0 0.0
    %66 = vmatprep.subr.mxu0 0.0
    %67 = vmatpush1.msra.mxu0 0.0
    %68 = vmatprep.subr.mxu0 0.0
    %69 = vmatpush1.msra.mxu0 0.0
    %70 = vmatprep.subr.mxu0 0.0
    %71 = vmatpush1.msra.mxu0 0.0
    %72 = vmatprep.subr.mxu0 0.0
    %73 = vmatpush1.msra.mxu0 0.0
    %74 = vmatprep.subr.mxu0 0.0
    %75 = vmatpush1.msra.mxu0 0.0
    %76 = vmatprep.subr.mxu0 0.0
    %77 = vmatpush1.msra.mxu0 0.0
    %78 = vmatprep.subr.mxu0 0.0
    %79 = vmatpush1.msra.mxu0 0.0
    %80 = vmatprep.subr.mxu0 0.0
    %81 = vmatpush1.msra.mxu0 0.0
    %82 = vmatprep.subr.mxu0 0.0
    %83 = vmatpush1.msra.mxu0 0.0
    %84 = vmatprep.subr.mxu0 0.0
    %85 = vmatpush1.msra.mxu0 0.0
    %86 = vmatprep.subr.mxu0 0.0
    %87 = vmatpush1.msra.mxu0 0.0
    %88 = vmatprep.subr.mxu0 0.0
    %89 = vmatpush1.msra.mxu0 0.0
    %90 = vmatprep.subr.mxu0 0.0
    %91 = vmatpush1.msra.mxu0 0.0
    %92 = vmatprep.subr.mxu0 0.0
    %93 = vmatpush1.msra.mxu0 0.0
    %94 = vmatprep.subr.mxu0 0.0
    %95 = vmatpush1.msra.mxu0 %v42
    %96 = vmatprep.subr.mxu0 0.0
    %97 = vmatpush2.msra.mxu0 0.0
    %98 = vmatprep.subr.mxu0 0.0
    %99 = vmatpush2.msra.mxu0 0.0
    %100 = vmatprep.subr.mxu0 0.0
    %101 = vmatpush2.msra.mxu0 0.0
    %102 = vmatprep.subr.mxu0 0.0
    %103 = vmatpush2.msra.mxu0 0.0
    %104 = vmatprep.subr.mxu0 0.0
    %105 = vmatpush2.msra.mxu0 0.0
    %106 = vmatprep.subr.mxu0 0.0
    %107 = vmatpush2.msra.mxu0 0.0
    %108 = vmatprep.subr.mxu0 0.0
    %109 = vmatpush2.msra.mxu0 0.0
    %110 = vmatprep.subr.mxu0 0.0
    %111 = vmatpush2.msra.mxu0 0.0
    %112 = vmatprep.subr.mxu0 0.0
    %113 = vmatpush2.msra.mxu0 0.0
    %114 = vmatprep.subr.mxu0 0.0
    %115 = vmatpush2.msra.mxu0 0.0
    %116 = vmatprep.subr.mxu0 0.0
    %117 = vmatpush2.msra.mxu0 0.0
    %118 = vmatprep.subr.mxu0 0.0
    %119 = vmatpush2.msra.mxu0 0.0
    %120 = vmatprep.subr.mxu0 0.0
    %121 = vmatpush2.msra.mxu0 0.0
    %122 = vmatprep.subr.mxu0 0.0
    %123 = vmatpush2.msra.mxu0 0.0
    %124 = vmatprep.subr.mxu0 0.0
    %125 = vmatpush2.msra.mxu0 0.0
    %126 = vmatprep.subr.mxu0 0.0
    %127 = vmatpush2.msra.mxu0 0.0
    %128 = vmatprep.mubr.f32.mxu0 0.0
    %129 = vmatmul.mubr.f32.gmra.mxu0 %v59
    %v130 = vpop.f32.mrf.mxu0
    %v131 = vadd.f32 %v50, %v130
    %v132 = vpop.f32.mrf.mxu0
    %133 = vmatprep.mubr.f32.mxu0 0.0
    %134 = vmatmul.mubr.f32.gmra.mxu0 %v62
    %v135 = vpop.f32.mrf.mxu0
    %v136 = vadd.f32 %v55, %v135
    %v137 = vpop.f32.mrf.mxu0
    %138 = vdwg.mxu0
    %v139 = vmax.f32 %v131, 0.0
    %v140 = vmax.f32 %v136, 0.0
    %s141 = scalar_lea.vmem [#allocation2], 32
    %v142 = vld [vmem:[%s141] sm:$0xff]
    %v143 = vld [vmem:[%s141 + $0x8] sm:$0xff]
    %144 = vset.pattern.permute.xlu0 2
    %145 = vperm.xlu0 %144, %v45
    %v146 = vpop.permute.xlu0 %145
    %148 = vset.pattern.permute.xlu0 2
    %149 = vperm.xlu0 %148, %v46
    %v150 = vpop.permute.xlu0 %149
    %vm152 = vcmask 130048
    %v154 = vsel %vm152, %v142, 0
    %v157 = vsel %vm152, %v143, 0
    %159 = vmatprep.subr.mxu0 0.0
    %160 = vmatpush1.msra.mxu0 0.0
    %161 = vmatprep.subr.mxu0 0.0
    %162 = vmatpush1.msra.mxu0 0.0
    %163 = vmatprep.subr.mxu0 0.0
    %164 = vmatpush1.msra.mxu0 0.0
    %165 = vmatprep.subr.mxu0 0.0
    %166 = vmatpush1.msra.mxu0 0.0
    %167 = vmatprep.subr.mxu0 0.0
    %168 = vmatpush1.msra.mxu0 0.0
    %169 = vmatprep.subr.mxu0 0.0
    %170 = vmatpush1.msra.mxu0 0.0
    %171 = vmatprep.subr.mxu0 0.0
    %172 = vmatpush1.msra.mxu0 0.0
    %173 = vmatprep.subr.mxu0 0.0
    %174 = vmatpush1.msra.mxu0 0.0
    %175 = vmatprep.subr.mxu0 0.0
    %176 = vmatpush1.msra.mxu0 0.0
    %177 = vmatprep.subr.mxu0 0.0
    %178 = vmatpush1.msra.mxu0 0.0
    %179 = vmatprep.subr.mxu0 0.0
    %180 = vmatpush1.msra.mxu0 0.0
    %181 = vmatprep.subr.mxu0 0.0
    %182 = vmatpush1.msra.mxu0 0.0
    %183 = vmatprep.subr.mxu0 0.0
    %184 = vmatpush1.msra.mxu0 0.0
    %185 = vmatprep.subr.mxu0 0.0
    %186 = vmatpush1.msra.mxu0 0.0
    %187 = vmatprep.subr.mxu0 0.0
    %188 = vmatpush1.msra.mxu0 %v140
    %189 = vmatprep.subr.mxu0 0.0
    %190 = vmatpush1.msra.mxu0 %v139
    %191 = vmatprep.subr.mxu0 0.0
    %192 = vmatpush2.msra.mxu0 0.0
    %193 = vmatprep.subr.mxu0 0.0
    %194 = vmatpush2.msra.mxu0 0.0
    %195 = vmatprep.subr.mxu0 0.0
    %196 = vmatpush2.msra.mxu0 0.0
    %197 = vmatprep.subr.mxu0 0.0
    %198 = vmatpush2.msra.mxu0 0.0
    %199 = vmatprep.subr.mxu0 0.0
    %200 = vmatpush2.msra.mxu0 0.0
    %201 = vmatprep.subr.mxu0 0.0
    %202 = vmatpush2.msra.mxu0 0.0
    %203 = vmatprep.subr.mxu0 0.0
    %204 = vmatpush2.msra.mxu0 0.0
    %205 = vmatprep.subr.mxu0 0.0
    %206 = vmatpush2.msra.mxu0 0.0
    %207 = vmatprep.subr.mxu0 0.0
    %208 = vmatpush2.msra.mxu0 0.0
    %209 = vmatprep.subr.mxu0 0.0
    %210 = vmatpush2.msra.mxu0 0.0
    %211 = vmatprep.subr.mxu0 0.0
    %212 = vmatpush2.msra.mxu0 0.0
    %213 = vmatprep.subr.mxu0 0.0
    %214 = vmatpush2.msra.mxu0 0.0
    %215 = vmatprep.subr.mxu0 0.0
    %216 = vmatpush2.msra.mxu0 0.0
    %217 = vmatprep.subr.mxu0 0.0
    %218 = vmatpush2.msra.mxu0 0.0
    %219 = vmatprep.subr.mxu0 0.0
    %220 = vmatpush2.msra.mxu0 0.0
    %221 = vmatprep.subr.mxu0 0.0
    %222 = vmatpush2.msra.mxu0 0.0
    %223 = vmatprep.mubr.f32.mxu0 0.0
    %224 = vmatmul.mubr.f32.gmra.mxu0 %v154
    %v225 = vpop.f32.mrf.mxu0
    %v226 = vadd.f32 %v146, %v225
    %v227 = vpop.f32.mrf.mxu0
    %228 = vmatprep.mubr.f32.mxu0 0.0
    %229 = vmatmul.mubr.f32.gmra.mxu0 %v157
    %v230 = vpop.f32.mrf.mxu0
    %v231 = vadd.f32 %v150, %v230
    %v232 = vpop.f32.mrf.mxu0
    %233 = vdwg.mxu0
    %234 = vset.pattern.permute.xlu0 0
    %235 = vperm.xlu0 %234, %v45
    %v236 = vpop.permute.xlu0 %235
    %238 = vset.pattern.permute.xlu0 0
    %239 = vperm.xlu0 %238, %v46
    %v240 = vpop.permute.xlu0 %239
    %v243 = vlaneseq
    %v244 = vshrl.u32 %v243, 7
    %v245 = vsub.s32 0, %v244
    %v246 = vrot.slane %v37, %v245
    %v248 = vmul.f32 %v236, %v246
    %v249 = vmul.f32 %v240, %v246
    %v250 = vand.u32 2147483647, %v248
    %vm251 = vcmp.le.f32.partialorder %v250, 0.7853982
    %vm252 = vcmp.lt.s32.totalorder %v248, 0
    %v253 = vand.u32 %v248, 2139095040
    %v254 = vshrl.u32 %v253, 23
    %v255 = vsub.s32 %v254, 127
    %v256 = vand.u32 2147483647, %v248
    %v257 = vand.u32 %v256, 8388607
    %v258 = vor.u32 %v257, 8388608
    %v259 = vsub.s32 0, %v258
    %v260 = vadd.s32 %v255, 1
    %vm261 = vcmp.gt.s32.totalorder %v260, 0
    %v262 = vsel %vm261, %v260, 0
    %v263 = vshrl.u32 %v262, 5
    %v264 = vand.u32 %v262, 31
    %v265 = vsub.s32 32, %v264
    %v266 = vshrl.u32 683565275, %v265
    %v267 = vshll.u32 683565275, %v264
    %v268 = vshrl.u32 2475754826, %v265
    %v269 = vor.u32 %v267, %v268
    %v270 = vshll.u32 2475754826, %v264
    %v271 = vshrl.u32 2131351028, %v265
    %v272 = vor.u32 %v270, %v271
    %v273 = vshll.u32 2131351028, %v264
    %v274 = vshrl.u32 2102212464, %v265
    %v275 = vor.u32 %v273, %v274
    %v276 = vshll.u32 2102212464, %v264
    %v277 = vshrl.u32 920167782, %v265
    %v278 = vor.u32 %v276, %v277
    %v279 = vshll.u32 920167782, %v264
    %v280 = vshrl.u32 1326507024, %v265
    %v281 = vor.u32 %v279, %v280
    %vm282 = vcmp.lt.s32.totalorder %v263, 1
    %vm283 = vcmp.lt.s32.totalorder %v263, 2
    %vm284 = vcmp.lt.s32.totalorder %v263, 3
    %vm285 = vcmp.lt.s32.totalorder %v263, 4
    %v286 = vsel %vm282, %v266, %v269
    %v287 = vsel %vm285, %v275, 2102212464
    %v288 = vsel %vm284, %v272, %v287
    %v289 = vsel %vm283, %v286, %v288
    %v290 = vsel %vm282, %v269, %v272
    %v291 = vsel %vm285, %v278, 920167782
    %v292 = vsel %vm284, %v275, %v291
    %v293 = vsel %vm283, %v290, %v292
    %v294 = vsel %vm282, %v272, %v275
    %v295 = vsel %vm285, %v281, 1326507024
    %v296 = vsel %vm284, %v278, %v295
    %v297 = vsel %vm283, %v294, %v296
    %v298 = vshll.u32 %v258, 8
    %v299 = vmul.u32.u64.compose %v298, %v297
    %v300 = vextract.low.u32 %v299
    %v301 = vextract.high.u32 %v299
    %v302 = vmul.u32.u64.compose %v298, %v293
    %v303 = vextract.low.u32 %v302
    %v304 = vextract.high.u32 %v302
    %v305 = vmul.u32 %v298, %v289
    %v306 = vadd.s32 %v301, %v303
    %vm307 = vc.u32 %v301, %v303
    %v308 = vadd.s32 %v304, 1
    %v309 = vsel %vm307, %v308, %v304
    %v310 = vadd.s32 %v305, %v309
    %v311 = vadd.s32 %v310, 536870912
    %v312 = vshrl.u32 %v311, 30
    %v313 = vshll.u32 %v312, 30
    %v314 = vsub.s32 %v310, %v313
    %vm315 = vcmp.lt.s32.totalorder %v314, 0
    %v316 = vsub.s32 0, %v314
    %v317 = vsel %vm315, %v316, %v314
    %v318 = vclz %v317
    %v319 = vsub.s32 %v318, 2
    %vm320 = vcmp.gt.s32.totalorder 0, %v319
    %v321 = vsel %vm320, 0, %v319
    %v322 = vsub.s32 32, %v321
    %v323 = vshll.u32 %v314, %v321
    %v324 = vshrl.u32 %v306, %v322
    %v325 = vor.u32 %v323, %v324
    %v326 = vsub.s32 4294967266, %v321
    %v327 = vadd.s32 %v326, 127
    %v328 = vshll.u32 %v327, 23
    %v329 = vor.u32 4788187, %v328
    %v330 = vand.u32 2147483647, %v329
    %v332 = vcvt.s32.f32 %v325
    %v333 = vmul.f32 %v332, %v330
    %v334 = vxor.u32 %v333, 2147483648
    %v335 = vsel %vm252, %v334, %v333
    %v336 = vsub.s32 4, %v312
    %v337 = vsel %vm252, %v336, %v312
    %v338 = vsel %vm251, %v248, %v335
    %v339 = vsel %vm251, 0, %v337
    %v340 = vcosq.f32.pop %v338
    %v341 = vsinq.f32.pop %v338
    %vm342 = vweird.f32 %v248
    %v343 = vadd.s32 %v339, 3
    %v344 = vand.u32 %v343, 3
    %vm345 = vcmp.lt.s32.totalorder %v344, 2
    %vm346 = vcmp.eq.s32.totalorder %v344, 0
    %v347 = vxor.u32 %v341, 2147483648
    %v348 = vsel %vm346, %v340, %v347
    %vm349 = vcmp.eq.s32.totalorder %v344, 2
    %v350 = vxor.u32 %v340, 2147483648
    %v351 = vsel %vm349, %v350, %v341
    %v352 = vsel %vm345, %v348, %v351
    %v353 = vsel %vm342, nan, %v352
    %v354 = vand.u32 2147483647, %v249
    %vm355 = vcmp.le.f32.partialorder %v354, 0.7853982
    %vm356 = vcmp.lt.s32.totalorder %v249, 0
    %v357 = vand.u32 %v249, 2139095040
    %v358 = vshrl.u32 %v357, 23
    %v359 = vsub.s32 %v358, 127
    %v360 = vand.u32 2147483647, %v249
    %v361 = vand.u32 %v360, 8388607
    %v362 = vor.u32 %v361, 8388608
    %v363 = vsub.s32 0, %v362
    %v364 = vadd.s32 %v359, 1
    %vm365 = vcmp.gt.s32.totalorder %v364, 0
    %v366 = vsel %vm365, %v364, 0
    %v367 = vshrl.u32 %v366, 5
    %v368 = vand.u32 %v366, 31
    %v369 = vsub.s32 32, %v368
    %v370 = vshrl.u32 683565275, %v369
    %v371 = vshll.u32 683565275, %v368
    %v372 = vshrl.u32 2475754826, %v369
    %v373 = vor.u32 %v371, %v372
    %v374 = vshll.u32 2475754826, %v368
    %v375 = vshrl.u32 2131351028, %v369
    %v376 = vor.u32 %v374, %v375
    %v377 = vshll.u32 2131351028, %v368
    %v378 = vshrl.u32 2102212464, %v369
    %v379 = vor.u32 %v377, %v378
    %v380 = vshll.u32 2102212464, %v368
    %v381 = vshrl.u32 920167782, %v369
    %v382 = vor.u32 %v380, %v381
    %v383 = vshll.u32 920167782, %v368
    %v384 = vshrl.u32 1326507024, %v369
    %v385 = vor.u32 %v383, %v384
    %vm386 = vcmp.lt.s32.totalorder %v367, 1
    %vm387 = vcmp.lt.s32.totalorder %v367, 2
    %vm388 = vcmp.lt.s32.totalorder %v367, 3
    %vm389 = vcmp.lt.s32.totalorder %v367, 4
    %v390 = vsel %vm386, %v370, %v373
    %v391 = vsel %vm389, %v379, 2102212464
    %v392 = vsel %vm388, %v376, %v391
    %v393 = vsel %vm387, %v390, %v392
    %v394 = vsel %vm386, %v373, %v376
    %v395 = vsel %vm389, %v382, 920167782
    %v396 = vsel %vm388, %v379, %v395
    %v397 = vsel %vm387, %v394, %v396
    %v398 = vsel %vm386, %v376, %v379
    %v399 = vsel %vm389, %v385, 1326507024
    %v400 = vsel %vm388, %v382, %v399
    %v401 = vsel %vm387, %v398, %v400
    %v402 = vshll.u32 %v362, 8
    %v403 = vmul.u32.u64.compose %v402, %v401
    %v404 = vextract.low.u32 %v403
    %v405 = vextract.high.u32 %v403
    %v406 = vmul.u32.u64.compose %v402, %v397
    %v407 = vextract.low.u32 %v406
    %v408 = vextract.high.u32 %v406
    %v409 = vmul.u32 %v402, %v393
    %v410 = vadd.s32 %v405, %v407
    %vm411 = vc.u32 %v405, %v407
    %v412 = vadd.s32 %v408, 1
    %v413 = vsel %vm411, %v412, %v408
    %v414 = vadd.s32 %v409, %v413
    %v415 = vadd.s32 %v414, 536870912
    %v416 = vshrl.u32 %v415, 30
    %v417 = vshll.u32 %v416, 30
    %v418 = vsub.s32 %v414, %v417
    %vm419 = vcmp.lt.s32.totalorder %v418, 0
    %v420 = vsub.s32 0, %v418
    %v421 = vsel %vm419, %v420, %v418
    %v422 = vclz %v421
    %v423 = vsub.s32 %v422, 2
    %vm424 = vcmp.gt.s32.totalorder 0, %v423
    %v425 = vsel %vm424, 0, %v423
    %v426 = vsub.s32 32, %v425
    %v427 = vshll.u32 %v418, %v425
    %v428 = vshrl.u32 %v410, %v426
    %v429 = vor.u32 %v427, %v428
    %v430 = vsub.s32 4294967266, %v425
    %v431 = vadd.s32 %v430, 127
    %v432 = vshll.u32 %v431, 23
    %v433 = vor.u32 4788187, %v432
    %v434 = vand.u32 2147483647, %v433
    %v436 = vcvt.s32.f32 %v429
    %v437 = vmul.f32 %v436, %v434
    %v438 = vxor.u32 %v437, 2147483648
    %v439 = vsel %vm356, %v438, %v437
    %v440 = vsub.s32 4, %v416
    %v441 = vsel %vm356, %v440, %v416
    %v442 = vsel %vm355, %v249, %v439
    %v443 = vsel %vm355, 0, %v441
    %v444 = vcosq.f32.pop %v442
    %v445 = vsinq.f32.pop %v442
    %vm446 = vweird.f32 %v249
    %v447 = vadd.s32 %v443, 3
    %v448 = vand.u32 %v447, 3
    %vm449 = vcmp.lt.s32.totalorder %v448, 2
    %vm450 = vcmp.eq.s32.totalorder %v448, 0
    %v451 = vxor.u32 %v445, 2147483648
    %v452 = vsel %vm450, %v444, %v451
    %vm453 = vcmp.eq.s32.totalorder %v448, 2
    %v454 = vxor.u32 %v444, 2147483648
    %v455 = vsel %vm453, %v454, %v445
    %v456 = vsel %vm449, %v452, %v455
    %v457 = vsel %vm446, nan, %v456
    %v458 = vand.u32 2147483647, %v248
    %vm459 = vcmp.le.f32.partialorder %v458, 0.7853982
    %vm460 = vcmp.lt.s32.totalorder %v248, 0
    %v461 = vand.u32 %v248, 2139095040
    %v462 = vshrl.u32 %v461, 23
    %v463 = vsub.s32 %v462, 127
    %v464 = vand.u32 2147483647, %v248
    %v465 = vand.u32 %v464, 8388607
    %v466 = vor.u32 %v465, 8388608
    %v467 = vsub.s32 0, %v466
    %v468 = vadd.s32 %v463, 1
    %vm469 = vcmp.gt.s32.totalorder %v468, 0
    %v470 = vsel %vm469, %v468, 0
    %v471 = vshrl.u32 %v470, 5
    %v472 = vand.u32 %v470, 31
    %v473 = vsub.s32 32, %v472
    %v474 = vshrl.u32 683565275, %v473
    %v475 = vshll.u32 683565275, %v472
    %v476 = vshrl.u32 2475754826, %v473
    %v477 = vor.u32 %v475, %v476
    %v478 = vshll.u32 2475754826, %v472
    %v479 = vshrl.u32 2131351028, %v473
    %v480 = vor.u32 %v478, %v479
    %v481 = vshll.u32 2131351028, %v472
    %v482 = vshrl.u32 2102212464, %v473
    %v483 = vor.u32 %v481, %v482
    %v484 = vshll.u32 2102212464, %v472
    %v485 = vshrl.u32 920167782, %v473
    %v486 = vor.u32 %v484, %v485
    %v487 = vshll.u32 920167782, %v472
    %v488 = vshrl.u32 1326507024, %v473
    %v489 = vor.u32 %v487, %v488
    %vm490 = vcmp.lt.s32.totalorder %v471, 1
    %vm491 = vcmp.lt.s32.totalorder %v471, 2
    %vm492 = vcmp.lt.s32.totalorder %v471, 3
    %vm493 = vcmp.lt.s32.totalorder %v471, 4
    %v494 = vsel %vm490, %v474, %v477
    %v495 = vsel %vm493, %v483, 2102212464
    %v496 = vsel %vm492, %v480, %v495
    %v497 = vsel %vm491, %v494, %v496
    %v498 = vsel %vm490, %v477, %v480
    %v499 = vsel %vm493, %v486, 920167782
    %v500 = vsel %vm492, %v483, %v499
    %v501 = vsel %vm491, %v498, %v500
    %v502 = vsel %vm490, %v480, %v483
    %v503 = vsel %vm493, %v489, 1326507024
    %v504 = vsel %vm492, %v486, %v503
    %v505 = vsel %vm491, %v502, %v504
    %v506 = vshll.u32 %v466, 8
    %v507 = vmul.u32.u64.compose %v506, %v505
    %v508 = vextract.low.u32 %v507
    %v509 = vextract.high.u32 %v507
    %v510 = vmul.u32.u64.compose %v506, %v501
    %v511 = vextract.low.u32 %v510
    %v512 = vextract.high.u32 %v510
    %v513 = vmul.u32 %v506, %v497
    %v514 = vadd.s32 %v509, %v511
    %vm515 = vc.u32 %v509, %v511
    %v516 = vadd.s32 %v512, 1
    %v517 = vsel %vm515, %v516, %v512
    %v518 = vadd.s32 %v513, %v517
    %v519 = vadd.s32 %v518, 536870912
    %v520 = vshrl.u32 %v519, 30
    %v521 = vshll.u32 %v520, 30
    %v522 = vsub.s32 %v518, %v521
    %vm523 = vcmp.lt.s32.totalorder %v522, 0
    %v524 = vsub.s32 0, %v522
    %v525 = vsel %vm523, %v524, %v522
    %v526 = vclz %v525
    %v527 = vsub.s32 %v526, 2
    %vm528 = vcmp.gt.s32.totalorder 0, %v527
    %v529 = vsel %vm528, 0, %v527
    %v530 = vsub.s32 32, %v529
    %v531 = vshll.u32 %v522, %v529
    %v532 = vshrl.u32 %v514, %v530
    %v533 = vor.u32 %v531, %v532
    %v534 = vsub.s32 4294967266, %v529
    %v535 = vadd.s32 %v534, 127
    %v536 = vshll.u32 %v535, 23
    %v537 = vor.u32 4788187, %v536
    %v538 = vand.u32 2147483647, %v537
    %v540 = vcvt.s32.f32 %v533
    %v541 = vmul.f32 %v540, %v538
    %v542 = vxor.u32 %v541, 2147483648
    %v543 = vsel %vm460, %v542, %v541
    %v544 = vsub.s32 4, %v520
    %v545 = vsel %vm460, %v544, %v520
    %v546 = vsel %vm459, %v248, %v543
    %v547 = vsel %vm459, 0, %v545
    %v548 = vcosq.f32.pop %v546
    %v549 = vsinq.f32.pop %v546
    %vm550 = vweird.f32 %v248
    %v551 = vand.u32 %v547, 3
    %vm552 = vcmp.lt.s32.totalorder %v551, 2
    %vm553 = vcmp.eq.s32.totalorder %v551, 0
    %v554 = vxor.u32 %v549, 2147483648
    %v555 = vsel %vm553, %v548, %v554
    %vm556 = vcmp.eq.s32.totalorder %v551, 2
    %v557 = vxor.u32 %v548, 2147483648
    %v558 = vsel %vm556, %v557, %v549
    %v559 = vsel %vm552, %v555, %v558
    %v560 = vsel %vm550, nan, %v559
    %v561 = vand.u32 2147483647, %v249
    %vm562 = vcmp.le.f32.partialorder %v561, 0.7853982
    %vm563 = vcmp.lt.s32.totalorder %v249, 0
    %v564 = vand.u32 %v249, 2139095040
    %v565 = vshrl.u32 %v564, 23
    %v566 = vsub.s32 %v565, 127
    %v567 = vand.u32 2147483647, %v249
    %v568 = vand.u32 %v567, 8388607
    %v569 = vor.u32 %v568, 8388608
    %v570 = vsub.s32 0, %v569
    %v571 = vadd.s32 %v566, 1
    %vm572 = vcmp.gt.s32.totalorder %v571, 0
    %v573 = vsel %vm572, %v571, 0
    %v574 = vshrl.u32 %v573, 5
    %v575 = vand.u32 %v573, 31
    %v576 = vsub.s32 32, %v575
    %v577 = vshrl.u32 683565275, %v576
    %v578 = vshll.u32 683565275, %v575
    %v579 = vshrl.u32 2475754826, %v576
    %v580 = vor.u32 %v578, %v579
    %v581 = vshll.u32 2475754826, %v575
    %v582 = vshrl.u32 2131351028, %v576
    %v583 = vor.u32 %v581, %v582
    %v584 = vshll.u32 2131351028, %v575
    %v585 = vshrl.u32 2102212464, %v576
    %v586 = vor.u32 %v584, %v585
    %v587 = vshll.u32 2102212464, %v575
    %v588 = vshrl.u32 920167782, %v576
    %v589 = vor.u32 %v587, %v588
    %v590 = vshll.u32 920167782, %v575
    %v591 = vshrl.u32 1326507024, %v576
    %v592 = vor.u32 %v590, %v591
    %vm593 = vcmp.lt.s32.totalorder %v574, 1
    %vm594 = vcmp.lt.s32.totalorder %v574, 2
    %vm595 = vcmp.lt.s32.totalorder %v574, 3
    %vm596 = vcmp.lt.s32.totalorder %v574, 4
    %v597 = vsel %vm593, %v577, %v580
    %v598 = vsel %vm596, %v586, 2102212464
    %v599 = vsel %vm595, %v583, %v598
    %v600 = vsel %vm594, %v597, %v599
    %v601 = vsel %vm593, %v580, %v583
    %v602 = vsel %vm596, %v589, 920167782
    %v603 = vsel %vm595, %v586, %v602
    %v604 = vsel %vm594, %v601, %v603
    %v605 = vsel %vm593, %v583, %v586
    %v606 = vsel %vm596, %v592, 1326507024
    %v607 = vsel %vm595, %v589, %v606
    %v608 = vsel %vm594, %v605, %v607
    %v609 = vshll.u32 %v569, 8
    %v610 = vmul.u32.u64.compose %v609, %v608
    %v611 = vextract.low.u32 %v610
    %v612 = vextract.high.u32 %v610
    %v613 = vmul.u32.u64.compose %v609, %v604
    %v614 = vextract.low.u32 %v613
    %v615 = vextract.high.u32 %v613
    %v616 = vmul.u32 %v609, %v600
    %v617 = vadd.s32 %v612, %v614
    %vm618 = vc.u32 %v612, %v614
    %v619 = vadd.s32 %v615, 1
    %v620 = vsel %vm618, %v619, %v615
    %v621 = vadd.s32 %v616, %v620
    %v622 = vadd.s32 %v621, 536870912
    %v623 = vshrl.u32 %v622, 30
    %v624 = vshll.u32 %v623, 30
    %v625 = vsub.s32 %v621, %v624
    %vm626 = vcmp.lt.s32.totalorder %v625, 0
    %v627 = vsub.s32 0, %v625
    %v628 = vsel %vm626, %v627, %v625
    %v629 = vclz %v628
    %v630 = vsub.s32 %v629, 2
    %vm631 = vcmp.gt.s32.totalorder 0, %v630
    %v632 = vsel %vm631, 0, %v630
    %v633 = vsub.s32 32, %v632
    %v634 = vshll.u32 %v625, %v632
    %v635 = vshrl.u32 %v617, %v633
    %v636 = vor.u32 %v634, %v635
    %v637 = vsub.s32 4294967266, %v632
    %v638 = vadd.s32 %v637, 127
    %v639 = vshll.u32 %v638, 23
    %v640 = vor.u32 4788187, %v639
    %v641 = vand.u32 2147483647, %v640
    %v643 = vcvt.s32.f32 %v636
    %v644 = vmul.f32 %v643, %v641
    %v645 = vxor.u32 %v644, 2147483648
    %v646 = vsel %vm563, %v645, %v644
    %v647 = vsub.s32 4, %v623
    %v648 = vsel %vm563, %v647, %v623
    %v649 = vsel %vm562, %v249, %v646
    %v650 = vsel %vm562, 0, %v648
    %v651 = vcosq.f32.pop %v649
    %v652 = vsinq.f32.pop %v649
    %vm653 = vweird.f32 %v249
    %v654 = vand.u32 %v650, 3
    %vm655 = vcmp.lt.s32.totalorder %v654, 2
    %vm656 = vcmp.eq.s32.totalorder %v654, 0
    %v657 = vxor.u32 %v652, 2147483648
    %v658 = vsel %vm656, %v651, %v657
    %vm659 = vcmp.eq.s32.totalorder %v654, 2
    %v660 = vxor.u32 %v651, 2147483648
    %v661 = vsel %vm659, %v660, %v652
    %v662 = vsel %vm655, %v658, %v661
    %v663 = vsel %vm653, nan, %v662
    %s664 = scalar_lea.vmem [#allocation2], 64
    %v665 = vld [vmem:[%s664] sm:$0xff]
    %v666 = vld [vmem:[%s664 + $0x8] sm:$0xff]
    %v667 = vld [vmem:[%s664 + $0x10] sm:$0xff]
    %v668 = vld [vmem:[%s664 + $0x18] sm:$0xff]
    %673 = vrot.lane.b32.xlu0 %v665, 112
    %v674 = vpop.permute.xlu0 %673
    %675 = vrot.lane.b32.xlu0 %v666, 112
    %v676 = vpop.permute.xlu0 %675
    %677 = vrot.lane.b32.xlu0 %v667, 112
    %v678 = vpop.permute.xlu0 %677
    %679 = vrot.lane.b32.xlu0 %v668, 112
    %v680 = vpop.permute.xlu0 %679
    %v681 = vsel %vm152, %v674, 0
    %v683 = vsel %vm152, %v676, 0
    %v685 = vsel %vm152, %v678, 0
    %v687 = vsel %vm152, %v680, 0
    %689 = vmatprep.subr.mxu0 0.0
    %690 = vmatpush1.msra.mxu0 0.0
    %691 = vmatprep.subr.mxu0 0.0
    %692 = vmatpush1.msra.mxu0 0.0
    %693 = vmatprep.subr.mxu0 0.0
    %694 = vmatpush1.msra.mxu0 0.0
    %695 = vmatprep.subr.mxu0 0.0
    %696 = vmatpush1.msra.mxu0 0.0
    %697 = vmatprep.subr.mxu0 0.0
    %698 = vmatpush1.msra.mxu0 0.0
    %699 = vmatprep.subr.mxu0 0.0
    %700 = vmatpush1.msra.mxu0 0.0
    %701 = vmatprep.subr.mxu0 0.0
    %702 = vmatpush1.msra.mxu0 0.0
    %703 = vmatprep.subr.mxu0 0.0
    %704 = vmatpush1.msra.mxu0 0.0
    %705 = vmatprep.subr.mxu0 0.0
    %706 = vmatpush1.msra.mxu0 0.0
    %707 = vmatprep.subr.mxu0 0.0
    %708 = vmatpush1.msra.mxu0 0.0
    %709 = vmatprep.subr.mxu0 0.0
    %710 = vmatpush1.msra.mxu0 0.0
    %711 = vmatprep.subr.mxu0 0.0
    %712 = vmatpush1.msra.mxu0 0.0
    %713 = vmatprep.subr.mxu0 0.0
    %714 = vmatpush1.msra.mxu0 0.0
    %715 = vmatprep.subr.mxu0 0.0
    %716 = vmatpush1.msra.mxu0 0.0
    %717 = vmatprep.subr.mxu0 0.0
    %718 = vmatpush1.msra.mxu0 %v663
    %719 = vmatprep.subr.mxu0 0.0
    %720 = vmatpush1.msra.mxu0 %v560
    %721 = vmatprep.subr.mxu0 0.0
    %722 = vmatpush2.msra.mxu0 0.0
    %723 = vmatprep.subr.mxu0 0.0
    %724 = vmatpush2.msra.mxu0 0.0
    %725 = vmatprep.subr.mxu0 0.0
    %726 = vmatpush2.msra.mxu0 0.0
    %727 = vmatprep.subr.mxu0 0.0
    %728 = vmatpush2.msra.mxu0 0.0
    %729 = vmatprep.subr.mxu0 0.0
    %730 = vmatpush2.msra.mxu0 0.0
    %731 = vmatprep.subr.mxu0 0.0
    %732 = vmatpush2.msra.mxu0 0.0
    %733 = vmatprep.subr.mxu0 0.0
    %734 = vmatpush2.msra.mxu0 0.0
    %735 = vmatprep.subr.mxu0 0.0
    %736 = vmatpush2.msra.mxu0 0.0
    %737 = vmatprep.subr.mxu0 0.0
    %738 = vmatpush2.msra.mxu0 0.0
    %739 = vmatprep.subr.mxu0 0.0
    %740 = vmatpush2.msra.mxu0 0.0
    %741 = vmatprep.subr.mxu0 0.0
    %742 = vmatpush2.msra.mxu0 0.0
    %743 = vmatprep.subr.mxu0 0.0
    %744 = vmatpush2.msra.mxu0 0.0
    %745 = vmatprep.subr.mxu0 0.0
    %746 = vmatpush2.msra.mxu0 0.0
    %747 = vmatprep.subr.mxu0 0.0
    %748 = vmatpush2.msra.mxu0 0.0
    %749 = vmatprep.subr.mxu0 0.0
    %750 = vmatpush2.msra.mxu0 0.0
    %751 = vmatprep.subr.mxu0 0.0
    %752 = vmatpush2.msra.mxu0 0.0
    %753 = vmatprep.mubr.f32.mxu0 0.0
    %754 = vmatmul.mubr.f32.gmra.mxu0 %v681
    %v755 = vpop.f32.mrf.mxu0
    %v756 = vadd.f32 0.0, %v755
    %v757 = vpop.f32.mrf.mxu0
    %758 = vmatprep.mubr.f32.mxu0 0.0
    %759 = vmatmul.mubr.f32.gmra.mxu0 %v683
    %v760 = vpop.f32.mrf.mxu0
    %v761 = vadd.f32 0.0, %v760
    %v762 = vpop.f32.mrf.mxu0
    %763 = vmatprep.mubr.f32.mxu0 0.0
    %764 = vmatmul.mubr.f32.gmra.mxu0 %v685
    %v765 = vpop.f32.mrf.mxu0
    %v766 = vadd.f32 0.0, %v765
    %v767 = vpop.f32.mrf.mxu0
    %768 = vmatprep.mubr.f32.mxu0 0.0
    %769 = vmatmul.mubr.f32.gmra.mxu0 %v687
    %v770 = vpop.f32.mrf.mxu0
    %v771 = vadd.f32 0.0, %v770
    %v772 = vpop.f32.mrf.mxu0
    %773 = vdwg.mxu0
    %v774 = vsel %vm152, %v665, 0
    %v776 = vsel %vm152, %v666, 0
    %v778 = vsel %vm152, %v667, 0
    %v780 = vsel %vm152, %v668, 0
    %782 = vmatprep.subr.mxu0 0.0
    %783 = vmatpush1.msra.mxu0 0.0
    %784 = vmatprep.subr.mxu0 0.0
    %785 = vmatpush1.msra.mxu0 0.0
    %786 = vmatprep.subr.mxu0 0.0
    %787 = vmatpush1.msra.mxu0 0.0
    %788 = vmatprep.subr.mxu0 0.0
    %789 = vmatpush1.msra.mxu0 0.0
    %790 = vmatprep.subr.mxu0 0.0
    %791 = vmatpush1.msra.mxu0 0.0
    %792 = vmatprep.subr.mxu0 0.0
    %793 = vmatpush1.msra.mxu0 0.0
    %794 = vmatprep.subr.mxu0 0.0
    %795 = vmatpush1.msra.mxu0 0.0
    %796 = vmatprep.subr.mxu0 0.0
    %797 = vmatpush1.msra.mxu0 0.0
    %798 = vmatprep.subr.mxu0 0.0
    %799 = vmatpush1.msra.mxu0 0.0
    %800 = vmatprep.subr.mxu0 0.0
    %801 = vmatpush1.msra.mxu0 0.0
    %802 = vmatprep.subr.mxu0 0.0
    %803 = vmatpush1.msra.mxu0 0.0
    %804 = vmatprep.subr.mxu0 0.0
    %805 = vmatpush1.msra.mxu0 0.0
    %806 = vmatprep.subr.mxu0 0.0
    %807 = vmatpush1.msra.mxu0 0.0
    %808 = vmatprep.subr.mxu0 0.0
    %809 = vmatpush1.msra.mxu0 0.0
    %810 = vmatprep.subr.mxu0 0.0
    %811 = vmatpush1.msra.mxu0 %v457
    %812 = vmatprep.subr.mxu0 0.0
    %813 = vmatpush1.msra.mxu0 %v353
    %814 = vmatprep.subr.mxu0 0.0
    %815 = vmatpush2.msra.mxu0 0.0
    %816 = vmatprep.subr.mxu0 0.0
    %817 = vmatpush2.msra.mxu0 0.0
    %818 = vmatprep.subr.mxu0 0.0
    %819 = vmatpush2.msra.mxu0 0.0
    %820 = vmatprep.subr.mxu0 0.0
    %821 = vmatpush2.msra.mxu0 0.0
    %822 = vmatprep.subr.mxu0 0.0
    %823 = vmatpush2.msra.mxu0 0.0
    %824 = vmatprep.subr.mxu0 0.0
    %825 = vmatpush2.msra.mxu0 0.0
    %826 = vmatprep.subr.mxu0 0.0
    %827 = vmatpush2.msra.mxu0 0.0
    %828 = vmatprep.subr.mxu0 0.0
    %829 = vmatpush2.msra.mxu0 0.0
    %830 = vmatprep.subr.mxu0 0.0
    %831 = vmatpush2.msra.mxu0 0.0
    %832 = vmatprep.subr.mxu0 0.0
    %833 = vmatpush2.msra.mxu0 0.0
    %834 = vmatprep.subr.mxu0 0.0
    %835 = vmatpush2.msra.mxu0 0.0
    %836 = vmatprep.subr.mxu0 0.0
    %837 = vmatpush2.msra.mxu0 0.0
    %838 = vmatprep.subr.mxu0 0.0
    %839 = vmatpush2.msra.mxu0 0.0
    %840 = vmatprep.subr.mxu0 0.0
    %841 = vmatpush2.msra.mxu0 0.0
    %842 = vmatprep.subr.mxu0 0.0
    %843 = vmatpush2.msra.mxu0 0.0
    %844 = vmatprep.subr.mxu0 0.0
    %845 = vmatpush2.msra.mxu0 0.0
    %846 = vmatprep.mubr.f32.mxu0 0.0
    %847 = vmatmul.mubr.f32.gmra.mxu0 %v774
    %v848 = vpop.f32.mrf.mxu0
    %v849 = vadd.f32 %v756, %v848
    %v850 = vpop.f32.mrf.mxu0
    %851 = vmatprep.mubr.f32.mxu0 0.0
    %852 = vmatmul.mubr.f32.gmra.mxu0 %v776
    %v853 = vpop.f32.mrf.mxu0
    %v854 = vadd.f32 %v761, %v853
    %v855 = vpop.f32.mrf.mxu0
    %856 = vmatprep.mubr.f32.mxu0 0.0
    %857 = vmatmul.mubr.f32.gmra.mxu0 %v778
    %v858 = vpop.f32.mrf.mxu0
    %v859 = vadd.f32 %v766, %v858
    %v860 = vpop.f32.mrf.mxu0
    %861 = vmatprep.mubr.f32.mxu0 0.0
    %862 = vmatmul.mubr.f32.gmra.mxu0 %v780
    %v863 = vpop.f32.mrf.mxu0
    %v864 = vadd.f32 %v771, %v863
    %v865 = vpop.f32.mrf.mxu0
    %866 = vdwg.mxu0
    %v867 = vld [vmem:[%s4] sm:$0xff]
    %v868 = vld [vmem:[%s4 + $0x8] sm:$0xff]
    %v869 = vld [vmem:[%s4 + $0x10] sm:$0xff]
    %v870 = vld [vmem:[%s4 + $0x18] sm:$0xff]
    %872 = vset.pattern.permute.xlu0 3
    %873 = vperm.xlu0 %872, %v867
    %v874 = vpop.permute.xlu0 %873
    %877 = vset.pattern.permute.xlu0 3
    %878 = vperm.xlu0 %877, %v868
    %v879 = vpop.permute.xlu0 %878
    %882 = vset.pattern.permute.xlu0 3
    %883 = vperm.xlu0 %882, %v869
    %v884 = vpop.permute.xlu0 %883
    %887 = vset.pattern.permute.xlu0 3
    %888 = vperm.xlu0 %887, %v870
    %v889 = vpop.permute.xlu0 %888
    %v891 = vadd.f32 %v849, %v874
    %v892 = vadd.f32 %v854, %v879
    %v893 = vadd.f32 %v859, %v884
    %v894 = vadd.f32 %v864, %v889
    %v895 = vmul.f32 %v891, 0.5
    %v896 = vmul.f32 %v892, 0.5
    %v897 = vmul.f32 %v893, 0.5
    %v898 = vmul.f32 %v894, 0.5
    %v899 = vmul.f32 %v891, 0.044715
    %v900 = vmul.f32 %v892, 0.044715
    %v901 = vmul.f32 %v893, 0.044715
    %v902 = vmul.f32 %v894, 0.044715
    %v903 = vmul.f32 %v899, %v891
    %v904 = vmul.f32 %v900, %v892
    %v905 = vmul.f32 %v901, %v893
    %v906 = vmul.f32 %v902, %v894
    %v907 = vmul.f32 %v903, %v891
    %v908 = vmul.f32 %v904, %v892
    %v909 = vmul.f32 %v905, %v893
    %v910 = vmul.f32 %v906, %v894
    %v911 = vadd.f32 %v891, %v907
    %v912 = vadd.f32 %v892, %v908
    %v913 = vadd.f32 %v893, %v909
    %v914 = vadd.f32 %v894, %v910
    %v915 = vmul.f32 %v911, 0.7978846
    %v916 = vmul.f32 %v912, 0.7978846
    %v917 = vmul.f32 %v913, 0.7978846
    %v918 = vmul.f32 %v914, 0.7978846
    %v919 = vtanh.pop %v915
    %v920 = vtanh.pop %v916
    %v921 = vtanh.pop %v917
    %v922 = vtanh.pop %v918
    %v923 = vadd.f32 %v919, 1.0
    %v924 = vadd.f32 %v920, 1.0
    %v925 = vadd.f32 %v921, 1.0
    %v926 = vadd.f32 %v922, 1.0
    %v927 = vmul.f32 %v895, %v923
    %v928 = vmul.f32 %v896, %v924
    %v929 = vmul.f32 %v897, %v925
    %v930 = vmul.f32 %v898, %v926
    %s931 = scalar_lea.vmem [#allocation2], 96
    %v932 = vld [vmem:[%s931] sm:$0xff]
    %v933 = vld [vmem:[%s931 + $0x8] sm:$0xff]
    %v934 = vld [vmem:[%s931 + $0x10] sm:$0xff]
    %v935 = vld [vmem:[%s931 + $0x18] sm:$0xff]
    %936 = vset.pattern.permute.xlu0 4
    %937 = vperm.xlu0 %936, %v867
    %v938 = vpop.permute.xlu0 %937
    %940 = vset.pattern.permute.xlu0 4
    %941 = vperm.xlu0 %940, %v868
    %v942 = vpop.permute.xlu0 %941
    %944 = vset.pattern.permute.xlu0 4
    %945 = vperm.xlu0 %944, %v869
    %v946 = vpop.permute.xlu0 %945
    %948 = vset.pattern.permute.xlu0 4
    %949 = vperm.xlu0 %948, %v870
    %v950 = vpop.permute.xlu0 %949
    %vm952 = vcmask 261120
    %v954 = vsel %vm952, %v932, 0
    %v957 = vsel %vm952, %v933, 0
    %v960 = vsel %vm952, %v934, 0
    %v963 = vsel %vm952, %v935, 0
    %965 = vmatprep.subr.mxu0 0.0
    %966 = vmatpush1.msra.mxu0 0.0
    %967 = vmatprep.subr.mxu0 0.0
    %968 = vmatpush1.msra.mxu0 0.0
    %969 = vmatprep.subr.mxu0 0.0
    %970 = vmatpush1.msra.mxu0 0.0
    %971 = vmatprep.subr.mxu0 0.0
    %972 = vmatpush1.msra.mxu0 0.0
    %973 = vmatprep.subr.mxu0 0.0
    %974 = vmatpush1.msra.mxu0 0.0
    %975 = vmatprep.subr.mxu0 0.0
    %976 = vmatpush1.msra.mxu0 0.0
    %977 = vmatprep.subr.mxu0 0.0
    %978 = vmatpush1.msra.mxu0 0.0
    %979 = vmatprep.subr.mxu0 0.0
    %980 = vmatpush1.msra.mxu0 0.0
    %981 = vmatprep.subr.mxu0 0.0
    %982 = vmatpush1.msra.mxu0 0.0
    %983 = vmatprep.subr.mxu0 0.0
    %984 = vmatpush1.msra.mxu0 0.0
    %985 = vmatprep.subr.mxu0 0.0
    %986 = vmatpush1.msra.mxu0 0.0
    %987 = vmatprep.subr.mxu0 0.0
    %988 = vmatpush1.msra.mxu0 0.0
    %989 = vmatprep.subr.mxu0 0.0
    %990 = vmatpush1.msra.mxu0 %v930
    %991 = vmatprep.subr.mxu0 0.0
    %992 = vmatpush1.msra.mxu0 %v929
    %993 = vmatprep.subr.mxu0 0.0
    %994 = vmatpush1.msra.mxu0 %v928
    %995 = vmatprep.subr.mxu0 0.0
    %996 = vmatpush1.msra.mxu0 %v927
    %997 = vmatprep.subr.mxu0 0.0
    %998 = vmatpush2.msra.mxu0 0.0
    %999 = vmatprep.subr.mxu0 0.0
    %1000 = vmatpush2.msra.mxu0 0.0
    %1001 = vmatprep.subr.mxu0 0.0
    %1002 = vmatpush2.msra.mxu0 0.0
    %1003 = vmatprep.subr.mxu0 0.0
    %1004 = vmatpush2.msra.mxu0 0.0
    %1005 = vmatprep.subr.mxu0 0.0
    %1006 = vmatpush2.msra.mxu0 0.0
    %1007 = vmatprep.subr.mxu0 0.0
    %1008 = vmatpush2.msra.mxu0 0.0
    %1009 = vmatprep.subr.mxu0 0.0
    %1010 = vmatpush2.msra.mxu0 0.0
    %1011 = vmatprep.subr.mxu0 0.0
    %1012 = vmatpush2.msra.mxu0 0.0
    %1013 = vmatprep.subr.mxu0 0.0
    %1014 = vmatpush2.msra.mxu0 0.0
    %1015 = vmatprep.subr.mxu0 0.0
    %1016 = vmatpush2.msra.mxu0 0.0
    %1017 = vmatprep.subr.mxu0 0.0
    %1018 = vmatpush2.msra.mxu0 0.0
    %1019 = vmatprep.subr.mxu0 0.0
    %1020 = vmatpush2.msra.mxu0 0.0
    %1021 = vmatprep.subr.mxu0 0.0
    %1022 = vmatpush2.msra.mxu0 0.0
    %1023 = vmatprep.subr.mxu0 0.0
    %1024 = vmatpush2.msra.mxu0 0.0
    %1025 = vmatprep.subr.mxu0 0.0
    %1026 = vmatpush2.msra.mxu0 0.0
    %1027 = vmatprep.subr.mxu0 0.0
    %1028 = vmatpush2.msra.mxu0 0.0
    %1029 = vmatprep.mubr.f32.mxu0 0.0
    %1030 = vmatmul.mubr.f32.gmra.mxu0 %v954
    %v1031 = vpop.f32.mrf.mxu0
    %v1032 = vadd.f32 %v938, %v1031
    %v1033 = vpop.f32.mrf.mxu0
    %1034 = vmatprep.mubr.f32.mxu0 0.0
    %1035 = vmatmul.mubr.f32.gmra.mxu0 %v957
    %v1036 = vpop.f32.mrf.mxu0
    %v1037 = vadd.f32 %v942, %v1036
    %v1038 = vpop.f32.mrf.mxu0
    %1039 = vmatprep.mubr.f32.mxu0 0.0
    %1040 = vmatmul.mubr.f32.gmra.mxu0 %v960
    %v1041 = vpop.f32.mrf.mxu0
    %v1042 = vadd.f32 %v946, %v1041
    %v1043 = vpop.f32.mrf.mxu0
    %1044 = vmatprep.mubr.f32.mxu0 0.0
    %1045 = vmatmul.mubr.f32.gmra.mxu0 %v963
    %v1046 = vpop.f32.mrf.mxu0
    %v1047 = vadd.f32 %v950, %v1046
    %v1048 = vpop.f32.mrf.mxu0
    %1049 = vdwg.mxu0
    %s1050 = scalar_lea.vmem [#allocation2], 128
    %v1051 = vld [vmem:[%s1050] sm:$0xff]
    %v1052 = vld [vmem:[%s1050 + $0x8] sm:$0xff]
    %v1053 = vld [vmem:[%s1050 + $0x10] sm:$0xff]
    %v1054 = vld [vmem:[%s1050 + $0x18] sm:$0xff]
    %1059 = vrot.lane.b32.xlu0 %v1051, 112
    %v1060 = vpop.permute.xlu0 %1059
    %1061 = vrot.lane.b32.xlu0 %v1052, 112
    %v1062 = vpop.permute.xlu0 %1061
    %1063 = vrot.lane.b32.xlu0 %v1053, 112
    %v1064 = vpop.permute.xlu0 %1063
    %1065 = vrot.lane.b32.xlu0 %v1054, 112
    %v1066 = vpop.permute.xlu0 %1065
    %v1067 = vsel %vm152, %v1060, 0
    %v1069 = vsel %vm152, %v1062, 0
    %v1071 = vsel %vm152, %v1064, 0
    %v1073 = vsel %vm152, %v1066, 0
    %1075 = vmatprep.subr.mxu0 0.0
    %1076 = vmatpush1.msra.mxu0 0.0
    %1077 = vmatprep.subr.mxu0 0.0
    %1078 = vmatpush1.msra.mxu0 0.0
    %1079 = vmatprep.subr.mxu0 0.0
    %1080 = vmatpush1.msra.mxu0 0.0
    %1081 = vmatprep.subr.mxu0 0.0
    %1082 = vmatpush1.msra.mxu0 0.0
    %1083 = vmatprep.subr.mxu0 0.0
    %1084 = vmatpush1.msra.mxu0 0.0
    %1085 = vmatprep.subr.mxu0 0.0
    %1086 = vmatpush1.msra.mxu0 0.0
    %1087 = vmatprep.subr.mxu0 0.0
    %1088 = vmatpush1.msra.mxu0 0.0
    %1089 = vmatprep.subr.mxu0 0.0
    %1090 = vmatpush1.msra.mxu0 0.0
    %1091 = vmatprep.subr.mxu0 0.0
    %1092 = vmatpush1.msra.mxu0 0.0
    %1093 = vmatprep.subr.mxu0 0.0
    %1094 = vmatpush1.msra.mxu0 0.0
    %1095 = vmatprep.subr.mxu0 0.0
    %1096 = vmatpush1.msra.mxu0 0.0
    %1097 = vmatprep.subr.mxu0 0.0
    %1098 = vmatpush1.msra.mxu0 0.0
    %1099 = vmatprep.subr.mxu0 0.0
    %1100 = vmatpush1.msra.mxu0 0.0
    %1101 = vmatprep.subr.mxu0 0.0
    %1102 = vmatpush1.msra.mxu0 0.0
    %1103 = vmatprep.subr.mxu0 0.0
    %1104 = vmatpush1.msra.mxu0 %v231
    %1105 = vmatprep.subr.mxu0 0.0
    %1106 = vmatpush1.msra.mxu0 %v226
    %1107 = vmatprep.subr.mxu0 0.0
    %1108 = vmatpush2.msra.mxu0 0.0
    %1109 = vmatprep.subr.mxu0 0.0
    %1110 = vmatpush2.msra.mxu0 0.0
    %1111 = vmatprep.subr.mxu0 0.0
    %1112 = vmatpush2.msra.mxu0 0.0
    %1113 = vmatprep.subr.mxu0 0.0
    %1114 = vmatpush2.msra.mxu0 0.0
    %1115 = vmatprep.subr.mxu0 0.0
    %1116 = vmatpush2.msra.mxu0 0.0
    %1117 = vmatprep.subr.mxu0 0.0
    %1118 = vmatpush2.msra.mxu0 0.0
    %1119 = vmatprep.subr.mxu0 0.0
    %1120 = vmatpush2.msra.mxu0 0.0
    %1121 = vmatprep.subr.mxu0 0.0
    %1122 = vmatpush2.msra.mxu0 0.0
    %1123 = vmatprep.subr.mxu0 0.0
    %1124 = vmatpush2.msra.mxu0 0.0
    %1125 = vmatprep.subr.mxu0 0.0
    %1126 = vmatpush2.msra.mxu0 0.0
    %1127 = vmatprep.subr.mxu0 0.0
    %1128 = vmatpush2.msra.mxu0 0.0
    %1129 = vmatprep.subr.mxu0 0.0
    %1130 = vmatpush2.msra.mxu0 0.0
    %1131 = vmatprep.subr.mxu0 0.0
    %1132 = vmatpush2.msra.mxu0 0.0
    %1133 = vmatprep.subr.mxu0 0.0
    %1134 = vmatpush2.msra.mxu0 0.0
    %1135 = vmatprep.subr.mxu0 0.0
    %1136 = vmatpush2.msra.mxu0 0.0
    %1137 = vmatprep.subr.mxu0 0.0
    %1138 = vmatpush2.msra.mxu0 0.0
    %1139 = vmatprep.mubr.f32.mxu0 0.0
    %1140 = vmatmul.mubr.f32.gmra.mxu0 %v1067
    %v1141 = vpop.f32.mrf.mxu0
    %v1142 = vadd.f32 0.0, %v1141
    %v1143 = vpop.f32.mrf.mxu0
    %1144 = vmatprep.mubr.f32.mxu0 0.0
    %1145 = vmatmul.mubr.f32.gmra.mxu0 %v1069
    %v1146 = vpop.f32.mrf.mxu0
    %v1147 = vadd.f32 0.0, %v1146
    %v1148 = vpop.f32.mrf.mxu0
    %1149 = vmatprep.mubr.f32.mxu0 0.0
    %1150 = vmatmul.mubr.f32.gmra.mxu0 %v1071
    %v1151 = vpop.f32.mrf.mxu0
    %v1152 = vadd.f32 0.0, %v1151
    %v1153 = vpop.f32.mrf.mxu0
    %1154 = vmatprep.mubr.f32.mxu0 0.0
    %1155 = vmatmul.mubr.f32.gmra.mxu0 %v1073
    %v1156 = vpop.f32.mrf.mxu0
    %v1157 = vadd.f32 0.0, %v1156
    %v1158 = vpop.f32.mrf.mxu0
    %1159 = vdwg.mxu0
    %v1160 = vsel %vm152, %v1051, 0
    %v1162 = vsel %vm152, %v1052, 0
    %v1164 = vsel %vm152, %v1053, 0
    %v1166 = vsel %vm152, %v1054, 0
    %1168 = vmatprep.subr.mxu0 0.0
    %1169 = vmatpush1.msra.mxu0 0.0
    %1170 = vmatprep.subr.mxu0 0.0
    %1171 = vmatpush1.msra.mxu0 0.0
    %1172 = vmatprep.subr.mxu0 0.0
    %1173 = vmatpush1.msra.mxu0 0.0
    %1174 = vmatprep.subr.mxu0 0.0
    %1175 = vmatpush1.msra.mxu0 0.0
    %1176 = vmatprep.subr.mxu0 0.0
    %1177 = vmatpush1.msra.mxu0 0.0
    %1178 = vmatprep.subr.mxu0 0.0
    %1179 = vmatpush1.msra.mxu0 0.0
    %1180 = vmatprep.subr.mxu0 0.0
    %1181 = vmatpush1.msra.mxu0 0.0
    %1182 = vmatprep.subr.mxu0 0.0
    %1183 = vmatpush1.msra.mxu0 0.0
    %1184 = vmatprep.subr.mxu0 0.0
    %1185 = vmatpush1.msra.mxu0 0.0
    %1186 = vmatprep.subr.mxu0 0.0
    %1187 = vmatpush1.msra.mxu0 0.0
    %1188 = vmatprep.subr.mxu0 0.0
    %1189 = vmatpush1.msra.mxu0 0.0
    %1190 = vmatprep.subr.mxu0 0.0
    %1191 = vmatpush1.msra.mxu0 0.0
    %1192 = vmatprep.subr.mxu0 0.0
    %1193 = vmatpush1.msra.mxu0 0.0
    %1194 = vmatprep.subr.mxu0 0.0
    %1195 = vmatpush1.msra.mxu0 0.0
    %1196 = vmatprep.subr.mxu0 0.0
    %1197 = vmatpush1.msra.mxu0 %v36
    %1198 = vmatprep.subr.mxu0 0.0
    %1199 = vmatpush1.msra.mxu0 %v35
    %1200 = vmatprep.subr.mxu0 0.0
    %1201 = vmatpush2.msra.mxu0 0.0
    %1202 = vmatprep.subr.mxu0 0.0
    %1203 = vmatpush2.msra.mxu0 0.0
    %1204 = vmatprep.subr.mxu0 0.0
    %1205 = vmatpush2.msra.mxu0 0.0
    %1206 = vmatprep.subr.mxu0 0.0
    %1207 = vmatpush2.msra.mxu0 0.0
    %1208 = vmatprep.subr.mxu0 0.0
    %1209 = vmatpush2.msra.mxu0 0.0
    %1210 = vmatprep.subr.mxu0 0.0
    %1211 = vmatpush2.msra.mxu0 0.0
    %1212 = vmatprep.subr.mxu0 0.0
    %1213 = vmatpush2.msra.mxu0 0.0
    %1214 = vmatprep.subr.mxu0 0.0
    %1215 = vmatpush2.msra.mxu0 0.0
    %1216 = vmatprep.subr.mxu0 0.0
    %1217 = vmatpush2.msra.mxu0 0.0
    %1218 = vmatprep.subr.mxu0 0.0
    %1219 = vmatpush2.msra.mxu0 0.0
    %1220 = vmatprep.subr.mxu0 0.0
    %1221 = vmatpush2.msra.mxu0 0.0
    %1222 = vmatprep.subr.mxu0 0.0
    %1223 = vmatpush2.msra.mxu0 0.0
    %1224 = vmatprep.subr.mxu0 0.0
    %1225 = vmatpush2.msra.mxu0 0.0
    %1226 = vmatprep.subr.mxu0 0.0
    %1227 = vmatpush2.msra.mxu0 0.0
    %1228 = vmatprep.subr.mxu0 0.0
    %1229 = vmatpush2.msra.mxu0 0.0
    %1230 = vmatprep.subr.mxu0 0.0
    %1231 = vmatpush2.msra.mxu0 0.0
    %1232 = vmatprep.mubr.f32.mxu0 0.0
    %1233 = vmatmul.mubr.f32.gmra.mxu0 %v1160
    %v1234 = vpop.f32.mrf.mxu0
    %v1235 = vadd.f32 %v1142, %v1234
    %v1236 = vpop.f32.mrf.mxu0
    %1237 = vmatprep.mubr.f32.mxu0 0.0
    %1238 = vmatmul.mubr.f32.gmra.mxu0 %v1162
    %v1239 = vpop.f32.mrf.mxu0
    %v1240 = vadd.f32 %v1147, %v1239
    %v1241 = vpop.f32.mrf.mxu0
    %1242 = vmatprep.mubr.f32.mxu0 0.0
    %1243 = vmatmul.mubr.f32.gmra.mxu0 %v1164
    %v1244 = vpop.f32.mrf.mxu0
    %v1245 = vadd.f32 %v1152, %v1244
    %v1246 = vpop.f32.mrf.mxu0
    %1247 = vmatprep.mubr.f32.mxu0 0.0
    %1248 = vmatmul.mubr.f32.gmra.mxu0 %v1166
    %v1249 = vpop.f32.mrf.mxu0
    %v1250 = vadd.f32 %v1157, %v1249
    %v1251 = vpop.f32.mrf.mxu0
    %1252 = vdwg.mxu0
    %1253 = vset.pattern.permute.xlu0 5
    %1254 = vperm.xlu0 %1253, %v867
    %v1255 = vpop.permute.xlu0 %1254
    %1257 = vset.pattern.permute.xlu0 5
    %1258 = vperm.xlu0 %1257, %v868
    %v1259 = vpop.permute.xlu0 %1258
    %1261 = vset.pattern.permute.xlu0 5
    %1262 = vperm.xlu0 %1261, %v869
    %v1263 = vpop.permute.xlu0 %1262
    %1265 = vset.pattern.permute.xlu0 5
    %1266 = vperm.xlu0 %1265, %v870
    %v1267 = vpop.permute.xlu0 %1266
    %v1269 = vadd.f32 %v1235, %v1255
    %v1270 = vadd.f32 %v1240, %v1259
    %v1271 = vadd.f32 %v1245, %v1263
    %v1272 = vadd.f32 %v1250, %v1267
    %v1273 = vmax.f32 %v1269, 0.0
    %v1274 = vmax.f32 %v1270, 0.0
    %v1275 = vmax.f32 %v1271, 0.0
    %v1276 = vmax.f32 %v1272, 0.0
    %v1277 = vadd.f32 %v1273, %v1032
    %v1278 = vadd.f32 %v1274, %v1037
    %v1279 = vadd.f32 %v1275, %v1042
    %v1280 = vadd.f32 %v1276, %v1047
    %1281 = vadd.xlane.f32.xlu0 %v1277
    %v1282 = vpop.xlane.xlu0 %1281
    %1283 = vadd.xlane.f32.xlu0 %v1278
    %v1284 = vpop.xlane.xlu0 %1283
    %1285 = vadd.xlane.f32.xlu0 %v1279
    %v1286 = vpop.xlane.xlu0 %1285
    %1287 = vadd.xlane.f32.xlu0 %v1280
    %v1288 = vpop.xlane.xlu0 %1287
    %v1289 = vrcp.pop 128.0
    %v1290 = vmul.f32 %v1282, %v1289
    %v1291 = vmul.f32 %v1284, %v1289
    %v1292 = vmul.f32 %v1286, %v1289
    %v1293 = vmul.f32 %v1288, %v1289
    %v1294 = vsub.f32 %v1277, %v1290
    %v1295 = vsub.f32 %v1278, %v1291
    %v1296 = vsub.f32 %v1279, %v1292
    %v1297 = vsub.f32 %v1280, %v1293
    %v1298 = vmul.f32 %v1294, %v1294
    %v1299 = vmul.f32 %v1295, %v1295
    %v1300 = vmul.f32 %v1296, %v1296
    %v1301 = vmul.f32 %v1297, %v1297
    %1302 = vadd.xlane.f32.xlu0 %v1298
    %v1303 = vpop.xlane.xlu0 %1302
    %1304 = vadd.xlane.f32.xlu0 %v1299
    %v1305 = vpop.xlane.xlu0 %1304
    %1306 = vadd.xlane.f32.xlu0 %v1300
    %v1307 = vpop.xlane.xlu0 %1306
    %1308 = vadd.xlane.f32.xlu0 %v1301
    %v1309 = vpop.xlane.xlu0 %1308
    %v1310 = vmul.f32 %v1303, %v1289
    %v1311 = vmul.f32 %v1305, %v1289
    %v1312 = vmul.f32 %v1307, %v1289
    %v1313 = vmul.f32 %v1309, %v1289
    %1314 = vset.pattern.permute.xlu0 8
    %1315 = vperm.xlu0 %1314, %v867
    %v1316 = vpop.permute.xlu0 %1315
    %1318 = vset.pattern.permute.xlu0 8
    %1319 = vperm.xlu0 %1318, %v868
    %v1320 = vpop.permute.xlu0 %1319
    %1322 = vset.pattern.permute.xlu0 8
    %1323 = vperm.xlu0 %1322, %v869
    %v1324 = vpop.permute.xlu0 %1323
    %1326 = vset.pattern.permute.xlu0 8
    %1327 = vperm.xlu0 %1326, %v870
    %v1328 = vpop.permute.xlu0 %1327
    %v1330 = vmul.f32 %v1316, %v1294
    %v1331 = vmul.f32 %v1320, %v1295
    %v1332 = vmul.f32 %v1324, %v1296
    %v1333 = vmul.f32 %v1328, %v1297
    %v1334 = vadd.f32 %v1310, 1e-05
    %v1335 = vadd.f32 %v1311, 1e-05
    %v1336 = vadd.f32 %v1312, 1e-05
    %v1337 = vadd.f32 %v1313, 1e-05
    %v1338 = vrsqrt.pop %v1334
    %v1339 = vrsqrt.pop %v1335
    %v1340 = vrsqrt.pop %v1336
    %v1341 = vrsqrt.pop %v1337
    %v1342 = vmul.f32 %v1330, %v1338
    %v1343 = vmul.f32 %v1331, %v1339
    %v1344 = vmul.f32 %v1332, %v1340
    %v1345 = vmul.f32 %v1333, %v1341
    %1346 = vset.pattern.permute.xlu0 9
    %1347 = vperm.xlu0 %1346, %v867
    %v1348 = vpop.permute.xlu0 %1347
    %1350 = vset.pattern.permute.xlu0 9
    %1351 = vperm.xlu0 %1350, %v868
    %v1352 = vpop.permute.xlu0 %1351
    %1354 = vset.pattern.permute.xlu0 9
    %1355 = vperm.xlu0 %1354, %v869
    %v1356 = vpop.permute.xlu0 %1355
    %1358 = vset.pattern.permute.xlu0 9
    %1359 = vperm.xlu0 %1358, %v870
    %v1360 = vpop.permute.xlu0 %1359
    %v1362 = vadd.f32 %v1342, %v1348
    %v1363 = vadd.f32 %v1343, %v1352
    %v1364 = vadd.f32 %v1344, %v1356
    %v1365 = vadd.f32 %v1345, %v1360
    %s1366 = scalar_lea.vmem [#allocation2], 160
    %v1367 = vld [vmem:[%s1366] sm:$0xff]
    %v1368 = vld [vmem:[%s1366 + $0x8] sm:$0xff]
    %v1369 = vld [vmem:[%s1366 + $0x10] sm:$0xff]
    %v1370 = vld [vmem:[%s1366 + $0x18] sm:$0xff]
    %1375 = vrot.lane.b32.xlu0 %v1367, 96
    %v1376 = vpop.permute.xlu0 %1375
    %1377 = vrot.lane.b32.xlu0 %v1368, 96
    %v1378 = vpop.permute.xlu0 %1377
    %1379 = vrot.lane.b32.xlu0 %v1369, 96
    %v1380 = vpop.permute.xlu0 %1379
    %1381 = vrot.lane.b32.xlu0 %v1370, 96
    %v1382 = vpop.permute.xlu0 %1381
    %v1383 = vsel %vm152, %v1376, 0
    %v1385 = vsel %vm152, %v1378, 0
    %v1387 = vsel %vm152, %v1380, 0
    %v1389 = vsel %vm152, %v1382, 0
    %1391 = vmatprep.subr.mxu0 0.0
    %1392 = vmatpush1.msra.mxu0 0.0
    %1393 = vmatprep.subr.mxu0 0.0
    %1394 = vmatpush1.msra.mxu0 0.0
    %1395 = vmatprep.subr.mxu0 0.0
    %1396 = vmatpush1.msra.mxu0 0.0
    %1397 = vmatprep.subr.mxu0 0.0
    %1398 = vmatpush1.msra.mxu0 0.0
    %1399 = vmatprep.subr.mxu0 0.0
    %1400 = vmatpush1.msra.mxu0 0.0
    %1401 = vmatprep.subr.mxu0 0.0
    %1402 = vmatpush1.msra.mxu0 0.0
    %1403 = vmatprep.subr.mxu0 0.0
    %1404 = vmatpush1.msra.mxu0 0.0
    %1405 = vmatprep.subr.mxu0 0.0
    %1406 = vmatpush1.msra.mxu0 0.0
    %1407 = vmatprep.subr.mxu0 0.0
    %1408 = vmatpush1.msra.mxu0 0.0
    %1409 = vmatprep.subr.mxu0 0.0
    %1410 = vmatpush1.msra.mxu0 0.0
    %1411 = vmatprep.subr.mxu0 0.0
    %1412 = vmatpush1.msra.mxu0 0.0
    %1413 = vmatprep.subr.mxu0 0.0
    %1414 = vmatpush1.msra.mxu0 0.0
    %1415 = vmatprep.subr.mxu0 0.0
    %1416 = vmatpush1.msra.mxu0 0.0
    %1417 = vmatprep.subr.mxu0 0.0
    %1418 = vmatpush1.msra.mxu0 0.0
    %1419 = vmatprep.subr.mxu0 0.0
    %1420 = vmatpush1.msra.mxu0 %v231
    %1421 = vmatprep.subr.mxu0 0.0
    %1422 = vmatpush1.msra.mxu0 %v226
    %1423 = vmatprep.subr.mxu0 0.0
    %1424 = vmatpush2.msra.mxu0 0.0
    %1425 = vmatprep.subr.mxu0 0.0
    %1426 = vmatpush2.msra.mxu0 0.0
    %1427 = vmatprep.subr.mxu0 0.0
    %1428 = vmatpush2.msra.mxu0 0.0
    %1429 = vmatprep.subr.mxu0 0.0
    %1430 = vmatpush2.msra.mxu0 0.0
    %1431 = vmatprep.subr.mxu0 0.0
    %1432 = vmatpush2.msra.mxu0 0.0
    %1433 = vmatprep.subr.mxu0 0.0
    %1434 = vmatpush2.msra.mxu0 0.0
    %1435 = vmatprep.subr.mxu0 0.0
    %1436 = vmatpush2.msra.mxu0 0.0
    %1437 = vmatprep.subr.mxu0 0.0
    %1438 = vmatpush2.msra.mxu0 0.0
    %1439 = vmatprep.subr.mxu0 0.0
    %1440 = vmatpush2.msra.mxu0 0.0
    %1441 = vmatprep.subr.mxu0 0.0
    %1442 = vmatpush2.msra.mxu0 0.0
    %1443 = vmatprep.subr.mxu0 0.0
    %1444 = vmatpush2.msra.mxu0 0.0
    %1445 = vmatprep.subr.mxu0 0.0
    %1446 = vmatpush2.msra.mxu0 0.0
    %1447 = vmatprep.subr.mxu0 0.0
    %1448 = vmatpush2.msra.mxu0 0.0
    %1449 = vmatprep.subr.mxu0 0.0
    %1450 = vmatpush2.msra.mxu0 0.0
    %1451 = vmatprep.subr.mxu0 0.0
    %1452 = vmatpush2.msra.mxu0 0.0
    %1453 = vmatprep.subr.mxu0 0.0
    %1454 = vmatpush2.msra.mxu0 0.0
    %1455 = vmatprep.mubr.f32.mxu0 0.0
    %1456 = vmatmul.mubr.f32.gmra.mxu0 %v1383
    %v1457 = vpop.f32.mrf.mxu0
    %v1458 = vadd.f32 0.0, %v1457
    %v1459 = vpop.f32.mrf.mxu0
    %1460 = vmatprep.mubr.f32.mxu0 0.0
    %1461 = vmatmul.mubr.f32.gmra.mxu0 %v1385
    %v1462 = vpop.f32.mrf.mxu0
    %v1463 = vadd.f32 0.0, %v1462
    %v1464 = vpop.f32.mrf.mxu0
    %1465 = vmatprep.mubr.f32.mxu0 0.0
    %1466 = vmatmul.mubr.f32.gmra.mxu0 %v1387
    %v1467 = vpop.f32.mrf.mxu0
    %v1468 = vadd.f32 0.0, %v1467
    %v1469 = vpop.f32.mrf.mxu0
    %1470 = vmatprep.mubr.f32.mxu0 0.0
    %1471 = vmatmul.mubr.f32.gmra.mxu0 %v1389
    %v1472 = vpop.f32.mrf.mxu0
    %v1473 = vadd.f32 0.0, %v1472
    %v1474 = vpop.f32.mrf.mxu0
    %1475 = vdwg.mxu0
    %v1476 = vsel %vm952, %v1367, 0
    %v1478 = vsel %vm952, %v1368, 0
    %v1480 = vsel %vm952, %v1369, 0
    %v1482 = vsel %vm952, %v1370, 0
    %1484 = vmatprep.subr.mxu0 0.0
    %1485 = vmatpush1.msra.mxu0 0.0
    %1486 = vmatprep.subr.mxu0 0.0
    %1487 = vmatpush1.msra.mxu0 0.0
    %1488 = vmatprep.subr.mxu0 0.0
    %1489 = vmatpush1.msra.mxu0 0.0
    %1490 = vmatprep.subr.mxu0 0.0
    %1491 = vmatpush1.msra.mxu0 0.0
    %1492 = vmatprep.subr.mxu0 0.0
    %1493 = vmatpush1.msra.mxu0 0.0
    %1494 = vmatprep.subr.mxu0 0.0
    %1495 = vmatpush1.msra.mxu0 0.0
    %1496 = vmatprep.subr.mxu0 0.0
    %1497 = vmatpush1.msra.mxu0 0.0
    %1498 = vmatprep.subr.mxu0 0.0
    %1499 = vmatpush1.msra.mxu0 0.0
    %1500 = vmatprep.subr.mxu0 0.0
    %1501 = vmatpush1.msra.mxu0 0.0
    %1502 = vmatprep.subr.mxu0 0.0
    %1503 = vmatpush1.msra.mxu0 0.0
    %1504 = vmatprep.subr.mxu0 0.0
    %1505 = vmatpush1.msra.mxu0 0.0
    %1506 = vmatprep.subr.mxu0 0.0
    %1507 = vmatpush1.msra.mxu0 0.0
    %1508 = vmatprep.subr.mxu0 0.0
    %1509 = vmatpush1.msra.mxu0 %v1365
    %1510 = vmatprep.subr.mxu0 0.0
    %1511 = vmatpush1.msra.mxu0 %v1364
    %1512 = vmatprep.subr.mxu0 0.0
    %1513 = vmatpush1.msra.mxu0 %v1363
    %1514 = vmatprep.subr.mxu0 0.0
    %1515 = vmatpush1.msra.mxu0 %v1362
    %1516 = vmatprep.subr.mxu0 0.0
    %1517 = vmatpush2.msra.mxu0 0.0
    %1518 = vmatprep.subr.mxu0 0.0
    %1519 = vmatpush2.msra.mxu0 0.0
    %1520 = vmatprep.subr.mxu0 0.0
    %1521 = vmatpush2.msra.mxu0 0.0
    %1522 = vmatprep.subr.mxu0 0.0
    %1523 = vmatpush2.msra.mxu0 0.0
    %1524 = vmatprep.subr.mxu0 0.0
    %1525 = vmatpush2.msra.mxu0 0.0
    %1526 = vmatprep.subr.mxu0 0.0
    %1527 = vmatpush2.msra.mxu0 0.0
    %1528 = vmatprep.subr.mxu0 0.0
    %1529 = vmatpush2.msra.mxu0 0.0
    %1530 = vmatprep.subr.mxu0 0.0
    %1531 = vmatpush2.msra.mxu0 0.0
    %1532 = vmatprep.subr.mxu0 0.0
    %1533 = vmatpush2.msra.mxu0 0.0
    %1534 = vmatprep.subr.mxu0 0.0
    %1535 = vmatpush2.msra.mxu0 0.0
    %1536 = vmatprep.subr.mxu0 0.0
    %1537 = vmatpush2.msra.mxu0 0.0
    %1538 = vmatprep.subr.mxu0 0.0
    %1539 = vmatpush2.msra.mxu0 0.0
    %1540 = vmatprep.subr.mxu0 0.0
    %1541 = vmatpush2.msra.mxu0 0.0
    %1542 = vmatprep.subr.mxu0 0.0
    %1543 = vmatpush2.msra.mxu0 0.0
    %1544 = vmatprep.subr.mxu0 0.0
    %1545 = vmatpush2.msra.mxu0 0.0
    %1546 = vmatprep.subr.mxu0 0.0
    %1547 = vmatpush2.msra.mxu0 0.0
    %1548 = vmatprep.mubr.f32.mxu0 0.0
    %1549 = vmatmul.mubr.f32.gmra.mxu0 %v1476
    %v1550 = vpop.f32.mrf.mxu0
    %v1551 = vadd.f32 %v1458, %v1550
    %v1552 = vpop.f32.mrf.mxu0
    %1553 = vmatprep.mubr.f32.mxu0 0.0
    %1554 = vmatmul.mubr.f32.gmra.mxu0 %v1478
    %v1555 = vpop.f32.mrf.mxu0
    %v1556 = vadd.f32 %v1463, %v1555
    %v1557 = vpop.f32.mrf.mxu0
    %1558 = vmatprep.mubr.f32.mxu0 0.0
    %1559 = vmatmul.mubr.f32.gmra.mxu0 %v1480
    %v1560 = vpop.f32.mrf.mxu0
    %v1561 = vadd.f32 %v1468, %v1560
    %v1562 = vpop.f32.mrf.mxu0
    %1563 = vmatprep.mubr.f32.mxu0 0.0
    %1564 = vmatmul.mubr.f32.gmra.mxu0 %v1482
    %v1565 = vpop.f32.mrf.mxu0
    %v1566 = vadd.f32 %v1473, %v1565
    %v1567 = vpop.f32.mrf.mxu0
    %1568 = vdwg.mxu0
    %1569 = vset.pattern.permute.xlu0 6
    %1570 = vperm.xlu0 %1569, %v867
    %v1571 = vpop.permute.xlu0 %1570
    %1573 = vset.pattern.permute.xlu0 6
    %1574 = vperm.xlu0 %1573, %v868
    %v1575 = vpop.permute.xlu0 %1574
    %1577 = vset.pattern.permute.xlu0 6
    %1578 = vperm.xlu0 %1577, %v869
    %v1579 = vpop.permute.xlu0 %1578
    %1581 = vset.pattern.permute.xlu0 6
    %1582 = vperm.xlu0 %1581, %v870
    %v1583 = vpop.permute.xlu0 %1582
    %v1585 = vadd.f32 %v1551, %v1571
    %v1586 = vadd.f32 %v1556, %v1575
    %v1587 = vadd.f32 %v1561, %v1579
    %v1588 = vadd.f32 %v1566, %v1583
    %v1589 = vmax.f32 %v1585, 0.0
    %v1590 = vmax.f32 %v1586, 0.0
    %v1591 = vmax.f32 %v1587, 0.0
    %v1592 = vmax.f32 %v1588, 0.0
    %v1593 = vadd.f32 %v1589, %v1032
    %v1594 = vadd.f32 %v1590, %v1037
    %v1595 = vadd.f32 %v1591, %v1042
    %v1596 = vadd.f32 %v1592, %v1047
    %1597 = vadd.xlane.f32.xlu0 %v1593
    %v1598 = vpop.xlane.xlu0 %1597
    %1599 = vadd.xlane.f32.xlu0 %v1594
    %v1600 = vpop.xlane.xlu0 %1599
    %1601 = vadd.xlane.f32.xlu0 %v1595
    %v1602 = vpop.xlane.xlu0 %1601
    %1603 = vadd.xlane.f32.xlu0 %v1596
    %v1604 = vpop.xlane.xlu0 %1603
    %v1605 = vmul.f32 %v1598, %v1289
    %v1606 = vmul.f32 %v1600, %v1289
    %v1607 = vmul.f32 %v1602, %v1289
    %v1608 = vmul.f32 %v1604, %v1289
    %v1609 = vsub.f32 %v1593, %v1605
    %v1610 = vsub.f32 %v1594, %v1606
    %v1611 = vsub.f32 %v1595, %v1607
    %v1612 = vsub.f32 %v1596, %v1608
    %v1613 = vmul.f32 %v1609, %v1609
    %v1614 = vmul.f32 %v1610, %v1610
    %v1615 = vmul.f32 %v1611, %v1611
    %v1616 = vmul.f32 %v1612, %v1612
    %1617 = vadd.xlane.f32.xlu0 %v1613
    %v1618 = vpop.xlane.xlu0 %1617
    %1619 = vadd.xlane.f32.xlu0 %v1614
    %v1620 = vpop.xlane.xlu0 %1619
    %1621 = vadd.xlane.f32.xlu0 %v1615
    %v1622 = vpop.xlane.xlu0 %1621
    %1623 = vadd.xlane.f32.xlu0 %v1616
    %v1624 = vpop.xlane.xlu0 %1623
    %v1625 = vmul.f32 %v1618, %v1289
    %v1626 = vmul.f32 %v1620, %v1289
    %v1627 = vmul.f32 %v1622, %v1289
    %v1628 = vmul.f32 %v1624, %v1289
    %1629 = vset.pattern.permute.xlu0 10
    %1630 = vperm.xlu0 %1629, %v867
    %v1631 = vpop.permute.xlu0 %1630
    %1633 = vset.pattern.permute.xlu0 10
    %1634 = vperm.xlu0 %1633, %v868
    %v1635 = vpop.permute.xlu0 %1634
    %1637 = vset.pattern.permute.xlu0 10
    %1638 = vperm.xlu0 %1637, %v869
    %v1639 = vpop.permute.xlu0 %1638
    %1641 = vset.pattern.permute.xlu0 10
    %1642 = vperm.xlu0 %1641, %v870
    %v1643 = vpop.permute.xlu0 %1642
    %v1645 = vmul.f32 %v1631, %v1609
    %v1646 = vmul.f32 %v1635, %v1610
    %v1647 = vmul.f32 %v1639, %v1611
    %v1648 = vmul.f32 %v1643, %v1612
    %v1649 = vadd.f32 %v1625, 1e-05
    %v1650 = vadd.f32 %v1626, 1e-05
    %v1651 = vadd.f32 %v1627, 1e-05
    %v1652 = vadd.f32 %v1628, 1e-05
    %v1653 = vrsqrt.pop %v1649
    %v1654 = vrsqrt.pop %v1650
    %v1655 = vrsqrt.pop %v1651
    %v1656 = vrsqrt.pop %v1652
    %v1657 = vmul.f32 %v1645, %v1653
    %v1658 = vmul.f32 %v1646, %v1654
    %v1659 = vmul.f32 %v1647, %v1655
    %v1660 = vmul.f32 %v1648, %v1656
    %1661 = vset.pattern.permute.xlu0 11
    %1662 = vperm.xlu0 %1661, %v867
    %v1663 = vpop.permute.xlu0 %1662
    %1665 = vset.pattern.permute.xlu0 11
    %1666 = vperm.xlu0 %1665, %v868
    %v1667 = vpop.permute.xlu0 %1666
    %1669 = vset.pattern.permute.xlu0 11
    %1670 = vperm.xlu0 %1669, %v869
    %v1671 = vpop.permute.xlu0 %1670
    %1673 = vset.pattern.permute.xlu0 11
    %1674 = vperm.xlu0 %1673, %v870
    %v1675 = vpop.permute.xlu0 %1674
    %v1677 = vadd.f32 %v1657, %v1663
    %v1678 = vadd.f32 %v1658, %v1667
    %v1679 = vadd.f32 %v1659, %v1671
    %v1680 = vadd.f32 %v1660, %v1675
    %s1681 = scalar_lea.vmem [#allocation2], 192
    %v1682 = vld [vmem:[%s1681] sm:$0xff]
    %v1683 = vld [vmem:[%s1681 + $0x8] sm:$0xff]
    %1684 = vset.pattern.permute.xlu0 7
    %1685 = vperm.xlu0 %1684, %v45
    %v1686 = vpop.permute.xlu0 %1685
    %1688 = vset.pattern.permute.xlu0 7
    %1689 = vperm.xlu0 %1688, %v46
    %v1690 = vpop.permute.xlu0 %1689
    %v1693 = vsel %vm952, %v1682, 0
    %v1696 = vsel %vm952, %v1683, 0
    %1698 = vmatprep.subr.mxu0 0.0
    %1699 = vmatpush1.msra.mxu0 0.0
    %1700 = vmatprep.subr.mxu0 0.0
    %1701 = vmatpush1.msra.mxu0 0.0
    %1702 = vmatprep.subr.mxu0 0.0
    %1703 = vmatpush1.msra.mxu0 0.0
    %1704 = vmatprep.subr.mxu0 0.0
    %1705 = vmatpush1.msra.mxu0 0.0
    %1706 = vmatprep.subr.mxu0 0.0
    %1707 = vmatpush1.msra.mxu0 0.0
    %1708 = vmatprep.subr.mxu0 0.0
    %1709 = vmatpush1.msra.mxu0 0.0
    %1710 = vmatprep.subr.mxu0 0.0
    %1711 = vmatpush1.msra.mxu0 0.0
    %1712 = vmatprep.subr.mxu0 0.0
    %1713 = vmatpush1.msra.mxu0 0.0
    %1714 = vmatprep.subr.mxu0 0.0
    %1715 = vmatpush1.msra.mxu0 0.0
    %1716 = vmatprep.subr.mxu0 0.0
    %1717 = vmatpush1.msra.mxu0 0.0
    %1718 = vmatprep.subr.mxu0 0.0
    %1719 = vmatpush1.msra.mxu0 0.0
    %1720 = vmatprep.subr.mxu0 0.0
    %1721 = vmatpush1.msra.mxu0 0.0
    %1722 = vmatprep.subr.mxu0 0.0
    %1723 = vmatpush1.msra.mxu0 %v1680
    %1724 = vmatprep.subr.mxu0 0.0
    %1725 = vmatpush1.msra.mxu0 %v1679
    %1726 = vmatprep.subr.mxu0 0.0
    %1727 = vmatpush1.msra.mxu0 %v1678
    %1728 = vmatprep.subr.mxu0 0.0
    %1729 = vmatpush1.msra.mxu0 %v1677
    %1730 = vmatprep.subr.mxu0 0.0
    %1731 = vmatpush2.msra.mxu0 0.0
    %1732 = vmatprep.subr.mxu0 0.0
    %1733 = vmatpush2.msra.mxu0 0.0
    %1734 = vmatprep.subr.mxu0 0.0
    %1735 = vmatpush2.msra.mxu0 0.0
    %1736 = vmatprep.subr.mxu0 0.0
    %1737 = vmatpush2.msra.mxu0 0.0
    %1738 = vmatprep.subr.mxu0 0.0
    %1739 = vmatpush2.msra.mxu0 0.0
    %1740 = vmatprep.subr.mxu0 0.0
    %1741 = vmatpush2.msra.mxu0 0.0
    %1742 = vmatprep.subr.mxu0 0.0
    %1743 = vmatpush2.msra.mxu0 0.0
    %1744 = vmatprep.subr.mxu0 0.0
    %1745 = vmatpush2.msra.mxu0 0.0
    %1746 = vmatprep.subr.mxu0 0.0
    %1747 = vmatpush2.msra.mxu0 0.0
    %1748 = vmatprep.subr.mxu0 0.0
    %1749 = vmatpush2.msra.mxu0 0.0
    %1750 = vmatprep.subr.mxu0 0.0
    %1751 = vmatpush2.msra.mxu0 0.0
    %1752 = vmatprep.subr.mxu0 0.0
    %1753 = vmatpush2.msra.mxu0 0.0
    %1754 = vmatprep.subr.mxu0 0.0
    %1755 = vmatpush2.msra.mxu0 0.0
    %1756 = vmatprep.subr.mxu0 0.0
    %1757 = vmatpush2.msra.mxu0 0.0
    %1758 = vmatprep.subr.mxu0 0.0
    %1759 = vmatpush2.msra.mxu0 0.0
    %1760 = vmatprep.subr.mxu0 0.0
    %1761 = vmatpush2.msra.mxu0 0.0
    %1762 = vmatprep.mubr.f32.mxu0 0.0
    %1763 = vmatmul.mubr.f32.gmra.mxu0 %v1693
    %v1764 = vpop.f32.mrf.mxu0
    %v1765 = vadd.f32 %v1686, %v1764
    %v1766 = vpop.f32.mrf.mxu0
    %1767 = vmatprep.mubr.f32.mxu0 0.0
    %1768 = vmatmul.mubr.f32.gmra.mxu0 %v1696
    %v1769 = vpop.f32.mrf.mxu0
    %v1770 = vadd.f32 %v1690, %v1769
    %v1771 = vpop.f32.mrf.mxu0
    %1772 = vdwg.mxu0
    %1773 = vst [vmem:[#allocation5] sm:$0xff] %v1765
    %1774 = vst [vmem:[#allocation5 + $0x8] sm:$0xff] %v1770
    // Predicated region
    $region26: #{tpu_custom_call.1} parent=1 // pred_check
      _
    $region27: #{tpu_custom_call.1} parent=1 // pred_check_branch
      %1776 = sbr.rel (0) target = $region29
    $region28: #{tpu_custom_call.1} parent=1 // pred_region
      %s1778 = ssub.s32 256, 256
      %1779 = vsyncadd [#allocation4], %s1778
      %s1780 = sshll.u32 [#allocation5], 4
      %s1781 = int_to_ptr.vmem [resolvable:$true] %s1780
      %1786 = dma.vmem_to_hbm [thread:$0]  %s1781, 256, %s5, [#allocation4], 128, 128, 8
    $region29: #{tpu_custom_call.1} parent=1 // pred_fallthru
      _
    // Predicated region
    $region30: #{tpu_custom_call.1} parent=1 // pred_check
      _
    $region31: #{tpu_custom_call.1} parent=1 // pred_check_branch
      %1788 = sbr.rel (0) target = $region33
    $region32: #{tpu_custom_call.1} parent=1 // pred_region
      %1789 = dma.done [#allocation4], 256
    $region33: #{tpu_custom_call.1} parent=1 // pred_fallthru
      _
    %1790 = vsyncpa [#allocation3], 1
    %1791 = vsyncpa [#allocation4], 1

</llo_original>
